<compile_context>
chip_gen: v7x
topology: tpu7x:2x2x1
jax: 0.10.0
libtpu: 0.0.40
codegen_flags: <defaults>
</compile_context>

<pallas_src>
import jax
import jax.numpy as jnp
from jax.experimental import pallas as pl
from jax.experimental.pallas import tpu as pltpu


LANE = 128  # TPU lane width; the 1-wide regress output is padded to this.


def make_mlp_kernel(num_dense):
    """Fused MLP kernel: num_dense x (Linear + ReLU) -> Linear (lane-padded) -> sigmoid."""

    def kernel(*refs):
        x_ref = refs[0]
        o_ref = refs[-1]
        h = x_ref[...]                                   # (TB, n) f32
        k = 1
        for _ in range(num_dense):
            w_ref, b_ref = refs[k], refs[k + 1]
            k += 2
            h = jnp.maximum(
                jnp.dot(h, w_ref[...], preferred_element_type=jnp.float32)
                + b_ref[...],
                0.0)
        wr_ref, br_ref = refs[k], refs[k + 1]            # lane-padded head
        z = jnp.dot(h, wr_ref[...], preferred_element_type=jnp.float32) + br_ref[...]
        o_ref[...] = jax.nn.sigmoid(z).astype(o_ref.dtype)

    return kernel


def mlp_forward(x, params, *, block_b=128):
    """x: (B, n) f32. params: {'dense': [(W, b), ...], 'regress': (Wr, br)}."""
    B, n = x.shape
    dense = params["dense"]
    Wr, br = params["regress"]
    out_dim = Wr.shape[0]                                # 1
    reg_in = Wr.shape[1]

    # Lane-dense head: pad regress weight/bias from 1 to LANE output columns.
    Wr_t_pad = jnp.zeros((reg_in, LANE), jnp.float32).at[:, :out_dim].set(Wr.T)
    br_pad = jnp.zeros((1, LANE), jnp.float32).at[0, :out_dim].set(br)

    # Batch tiling: one block for small B, otherwise 'parallel' tiles of block_b rows.
    if B <= block_b:
        TB = B
        x_pad = x
    else:
        TB = block_b
        B_pad = pl.cdiv(B, TB) * TB
        x_pad = jnp.zeros((B_pad, n), x.dtype).at[:B].set(x)
    nb = x_pad.shape[0] // TB

    args = [x_pad]
    in_specs = [pl.BlockSpec((TB, n), lambda i: (i, 0))]
    for (W, b) in dense:
        d_out, d_in = W.shape
        args.append(W.T)                                 # (d_in, d_out)
        in_specs.append(pl.BlockSpec((d_in, d_out), lambda i: (0, 0)))
        args.append(b.reshape(1, d_out))
        in_specs.append(pl.BlockSpec((1, d_out), lambda i: (0, 0)))
    args += [Wr_t_pad, br_pad]
    in_specs += [pl.BlockSpec((reg_in, LANE), lambda i: (0, 0)),
                 pl.BlockSpec((1, LANE), lambda i: (0, 0))]

    out_pad = pl.pallas_call(
        make_mlp_kernel(len(dense)),
        out_shape=jax.ShapeDtypeStruct((x_pad.shape[0], LANE), jnp.float32),
        grid=(nb,),
        in_specs=in_specs,
        out_specs=pl.BlockSpec((TB, LANE), lambda i: (i, 0)),
        compiler_params=pltpu.CompilerParams(
            dimension_semantics=("parallel",)),
    )(*args)

    return out_pad[:B, :out_dim]                         # (B, 1)


# ---------------------------------------------------------------------------
# Pure-JAX reference (mirrors the PyTorch forward) and PyTorch-style init.
# ---------------------------------------------------------------------------
def ref_forward(x, params):
    h = x
    for (W, b) in params["dense"]:
        h = jnp.maximum(h @ W.T + b, 0.0)
    Wr, br = params["regress"]
    return jax.nn.sigmoid(h @ Wr.T + br)


def init_params(key, n, num_layer):
    """Deterministic uniform(-1/sqrt(fan_in), 1/sqrt(fan_in)) init, PyTorch shapes."""
    dense = []
    in_f = n
    for i in range(num_layer):
        out_f = 512 if i == 0 else 256 * 2 ** (i + 1)
        scale = 1.0 / jnp.sqrt(jnp.float32(in_f))
        key, kw, kb = jax.random.split(key, 3)
        W = jax.random.uniform(kw, (out_f, in_f), jnp.float32, -scale, scale)
        b = jax.random.uniform(kb, (out_f,), jnp.float32, -scale, scale)
        dense.append((W, b))
        in_f = out_f
    reg_in = 256 * 2 ** num_layer
    scale = 1.0 / jnp.sqrt(jnp.float32(reg_in))
    key, kw, kb = jax.random.split(key, 3)
    Wr = jax.random.uniform(kw, (1, reg_in), jnp.float32, -scale, scale)
    br = jax.random.uniform(kb, (1,), jnp.float32, -scale, scale)
    return {"dense": dense, "regress": (Wr, br)}


if __name__ == "__main__":
    n = 16          # input features
    num_layer = 2   # -> Linear(16,512)+ReLU, Linear(512,1024)+ReLU, Linear(1024,1), Sigmoid
    batch = 8

    root = jax.random.PRNGKey(0)
    kp, kx = jax.random.split(root)
    params = init_params(kp, n, num_layer)
    x = jax.random.normal(kx, (batch, n), jnp.float32)

    out = jax.block_until_ready(mlp_forward(x, params))
    assert out.shape == (batch, 1), out.shape

    ref = jax.block_until_ready(ref_forward(x, params))
    assert jnp.allclose(out, ref, rtol=1e-4, atol=1e-4), \
        float(jnp.max(jnp.abs(out - ref)))

    print("KERNEL_OK")
</pallas_src>

<mosaic_0001>
module attributes {stable_mosaic.version = 11 : i64} {
  func.func @kernel(%arg0: i32, %arg1: memref<8x16xf32, #tpu.memory_space<vmem>>, %arg2: memref<16x512xf32, #tpu.memory_space<vmem>>, %arg3: memref<1x512xf32, #tpu.memory_space<vmem>>, %arg4: memref<512x1024xf32, #tpu.memory_space<vmem>>, %arg5: memref<1x1024xf32, #tpu.memory_space<vmem>>, %arg6: memref<1024x128xf32, #tpu.memory_space<vmem>>, %arg7: memref<1x128xf32, #tpu.memory_space<vmem>>, %arg8: memref<8x128xf32, #tpu.memory_space<vmem>>) attributes {dimension_semantics = [#tpu.dimension_semantics<parallel>], iteration_bounds = array<i64: 1>, scalar_prefetch = 0 : i64, scratch_operands = 0 : i64, tpu.core_type = #tpu.core_type<tc>, window_params = [{transform_indices = @transform_0, window_bounds = array<i64: 8, 16>}, {pipeline_mode = #tpu.pipeline_mode<synchronous>, transform_indices = @transform_1, window_bounds = array<i64: 16, 512>}, {pipeline_mode = #tpu.pipeline_mode<synchronous>, transform_indices = @transform_2, window_bounds = array<i64: 1, 512>}, {pipeline_mode = #tpu.pipeline_mode<synchronous>, transform_indices = @transform_3, window_bounds = array<i64: 512, 1024>}, {pipeline_mode = #tpu.pipeline_mode<synchronous>, transform_indices = @transform_4, window_bounds = array<i64: 1, 1024>}, {pipeline_mode = #tpu.pipeline_mode<synchronous>, transform_indices = @transform_5, window_bounds = array<i64: 1024, 128>}, {pipeline_mode = #tpu.pipeline_mode<synchronous>, transform_indices = @transform_6, window_bounds = array<i64: 1, 128>}, {transform_indices = @transform_7, window_bounds = array<i64: 8, 128>}]} {
    %c0 = arith.constant 0 : index
    %c0_0 = arith.constant 0 : index
    %0 = vector.load %arg1[%c0, %c0_0] : memref<8x16xf32, #tpu.memory_space<vmem>>, vector<8x16xf32>
    %c0_1 = arith.constant 0 : index
    %c0_2 = arith.constant 0 : index
    %1 = vector.load %arg2[%c0_1, %c0_2] : memref<16x512xf32, #tpu.memory_space<vmem>>, vector<16x512xf32>
    %cst = arith.constant dense<0.000000e+00> : vector<8x512xf32>
    %2 = tpu.matmul %0, %1, %cst {dimension_numbers = #tpu.dot_dimension_numbers<[1], [0], [0], [1], [0, 0, 1, 1], [], []>} : vector<8x16xf32>, vector<16x512xf32>, vector<8x512xf32> -> vector<8x512xf32>
    %c0_3 = arith.constant 0 : index
    %c0_4 = arith.constant 0 : index
    %3 = vector.load %arg3[%c0_3, %c0_4] : memref<1x512xf32, #tpu.memory_space<vmem>>, vector<1x512xf32>
    %4 = vector.broadcast %3 : vector<1x512xf32> to vector<8x512xf32>
    %5 = arith.addf %2, %4 : vector<8x512xf32>
    %cst_5 = arith.constant 0.000000e+00 : f32
    %6 = vector.broadcast %cst_5 : f32 to vector<8x512xf32>
    %7 = arith.maximumf %5, %6 : vector<8x512xf32>
    %c0_6 = arith.constant 0 : index
    %c0_7 = arith.constant 0 : index
    %8 = vector.load %arg4[%c0_6, %c0_7] : memref<512x1024xf32, #tpu.memory_space<vmem>>, vector<512x1024xf32>
    %cst_8 = arith.constant dense<0.000000e+00> : vector<8x1024xf32>
    %9 = tpu.matmul %7, %8, %cst_8 {dimension_numbers = #tpu.dot_dimension_numbers<[1], [0], [0], [1], [0, 0, 1, 1], [], []>} : vector<8x512xf32>, vector<512x1024xf32>, vector<8x1024xf32> -> vector<8x1024xf32>
    %c0_9 = arith.constant 0 : index
    %c0_10 = arith.constant 0 : index
    %10 = vector.load %arg5[%c0_9, %c0_10] : memref<1x1024xf32, #tpu.memory_space<vmem>>, vector<1x1024xf32>
    %11 = vector.broadcast %10 : vector<1x1024xf32> to vector<8x1024xf32>
    %12 = arith.addf %9, %11 : vector<8x1024xf32>
    %cst_11 = arith.constant 0.000000e+00 : f32
    %13 = vector.broadcast %cst_11 : f32 to vector<8x1024xf32>
    %14 = arith.maximumf %12, %13 : vector<8x1024xf32>
    %c0_12 = arith.constant 0 : index
    %c0_13 = arith.constant 0 : index
    %15 = vector.load %arg6[%c0_12, %c0_13] : memref<1024x128xf32, #tpu.memory_space<vmem>>, vector<1024x128xf32>
    %cst_14 = arith.constant dense<0.000000e+00> : vector<8x128xf32>
    %16 = tpu.matmul %14, %15, %cst_14 {dimension_numbers = #tpu.dot_dimension_numbers<[1], [0], [0], [1], [0, 0, 1, 1], [], []>} : vector<8x1024xf32>, vector<1024x128xf32>, vector<8x128xf32> -> vector<8x128xf32>
    %c0_15 = arith.constant 0 : index
    %c0_16 = arith.constant 0 : index
    %17 = vector.load %arg7[%c0_15, %c0_16] : memref<1x128xf32, #tpu.memory_space<vmem>>, vector<1x128xf32>
    %18 = vector.broadcast %17 : vector<1x128xf32> to vector<8x128xf32>
    %19 = arith.addf %16, %18 : vector<8x128xf32>
    %20 = arith.negf %19 : vector<8x128xf32>
    %21 = math.exp %20 : vector<8x128xf32>
    %cst_17 = arith.constant 1.000000e+00 : f32
    %22 = vector.broadcast %cst_17 : f32 to vector<8x128xf32>
    %23 = arith.addf %22, %21 : vector<8x128xf32>
    %24 = arith.divf %22, %23 : vector<8x128xf32>
    %c0_18 = arith.constant 0 : index
    %c0_19 = arith.constant 0 : index
    %25 = vector.load %arg8[%c0_18, %c0_19] : memref<8x128xf32, #tpu.memory_space<vmem>>, vector<8x128xf32>
    tpu.vector_store %arg8[%c0_18, %c0_19], %24 {strides = array<i32>} : memref<8x128xf32, #tpu.memory_space<vmem>>, vector<8x128xf32>,
    return
  }
  func.func @transform_0(%arg0: i32) -> (i32, i32) {
    %c0_i32 = arith.constant 0 : i32
    %c0_i32_0 = arith.constant 0 : i32
    return %arg0, %c0_i32 : i32, i32
  }
  func.func @transform_1(%arg0: i32) -> (i32, i32) {
    %c0_i32 = arith.constant 0 : i32
    %c0_i32_0 = arith.constant 0 : i32
    %c0_i32_1 = arith.constant 0 : i32
    return %c0_i32, %c0_i32_0 : i32, i32
  }
  func.func @transform_2(%arg0: i32) -> (i32, i32) {
    %c0_i32 = arith.constant 0 : i32
    %c0_i32_0 = arith.constant 0 : i32
    %c0_i32_1 = arith.constant 0 : i32
    return %c0_i32, %c0_i32_0 : i32, i32
  }
  func.func @transform_3(%arg0: i32) -> (i32, i32) {
    %c0_i32 = arith.constant 0 : i32
    %c0_i32_0 = arith.constant 0 : i32
    %c0_i32_1 = arith.constant 0 : i32
    return %c0_i32, %c0_i32_0 : i32, i32
  }
  func.func @transform_4(%arg0: i32) -> (i32, i32) {
    %c0_i32 = arith.constant 0 : i32
    %c0_i32_0 = arith.constant 0 : i32
    %c0_i32_1 = arith.constant 0 : i32
    return %c0_i32, %c0_i32_0 : i32, i32
  }
  func.func @transform_5(%arg0: i32) -> (i32, i32) {
    %c0_i32 = arith.constant 0 : i32
    %c0_i32_0 = arith.constant 0 : i32
    %c0_i32_1 = arith.constant 0 : i32
    return %c0_i32, %c0_i32_0 : i32, i32
  }
  func.func @transform_6(%arg0: i32) -> (i32, i32) {
    %c0_i32 = arith.constant 0 : i32
    %c0_i32_0 = arith.constant 0 : i32
    %c0_i32_1 = arith.constant 0 : i32
    return %c0_i32, %c0_i32_0 : i32, i32
  }
  func.func @transform_7(%arg0: i32) -> (i32, i32) {
    %c0_i32 = arith.constant 0 : i32
    %c0_i32_0 = arith.constant 0 : i32
    return %arg0, %c0_i32 : i32, i32
  }
}

</mosaic_0001>

<llo_original>
// kernel: tpu_custom_call.1
$region0: #{tpu_custom_call.1}
  #allocation0 [shape = 'u32[]', space=smem, size = 0x4, offset = 0x4, fixed_abs, tag = 'smem constant byte address 0x4 - core index']
  #allocation1 [shape = 'u32[144,128]{1,0:T(1,128)}', space=vmem, size = 0x12000, scoped, tag = 'internal scratch']
  %s0 = inlined_call_operand.hbm [shape: f32[8,16], index: 0, kind: input, shape index: {}]
  %s1 = inlined_call_operand.hbm [shape: f32[16,512], index: 1, kind: input, shape index: {}]
  %s2 = inlined_call_operand.hbm [shape: f32[1,512], index: 2, kind: input, shape index: {}]
  %s3 = inlined_call_operand.hbm [shape: f32[512,1024], index: 3, kind: input, shape index: {}]
  %s4 = inlined_call_operand.hbm [shape: f32[1,1024], index: 4, kind: input, shape index: {}]
  %s5 = inlined_call_operand.hbm [shape: f32[1024,128], index: 5, kind: input, shape index: {}]
  %s6 = inlined_call_operand.hbm [shape: f32[1,128], index: 6, kind: input, shape index: {}]
  %s7 = inlined_call_operand.hbm [shape: f32[8,128], index: 7, kind: output, shape index: {}]
  %s8 = sld [smem:[#allocation0]]
  $region66: #{tpu_custom_call.1} parent=0
    _
  %s10 = ssub.s32 1, %s8
  %s11 = scalar_select 0, %s10, %s8
  $region1: #{tpu_custom_call.1} parent=0
    #allocation2 [shape = 'u8[4096]{0}', space=vmem, size = 0x1000, scoped, tag = 'input window, operand 0, single buffered']
    #allocation3 [shape = 's32[1]{0}', space=sflag, size = 0x4, scoped, tag = 'scoped memory for tpu_custom_call.1']
    #allocation4 [shape = 's32[1]{0}', space=sflag, size = 0x4, scoped, tag = 'scoped memory for tpu_custom_call.1']
    #allocation5 [shape = 'u8[32768]{0}', space=vmem, size = 0x8000, scoped, tag = 'input window, operand 1, single buffered']
    #allocation6 [shape = 's32[1]{0}', space=sflag, size = 0x4, scoped, tag = 'scoped memory for tpu_custom_call.1']
    #allocation7 [shape = 'u8[2048]{0}', space=vmem, size = 0x800, scoped, tag = 'input window, operand 2, single buffered']
    #allocation8 [shape = 'u8[2097152]{0}', space=vmem, size = 0x200000, scoped, tag = 'input window, operand 3, single buffered']
    #allocation9 [shape = 's32[1]{0}', space=sflag, size = 0x4, scoped, tag = 'scoped memory for tpu_custom_call.1']
    #allocation10 [shape = 'u8[4096]{0}', space=vmem, size = 0x1000, scoped, tag = 'input window, operand 4, single buffered']
    #allocation11 [shape = 'u8[524288]{0}', space=vmem, size = 0x80000, scoped, tag = 'input window, operand 5, single buffered']
    #allocation12 [shape = 's32[1]{0}', space=sflag, size = 0x4, scoped, tag = 'scoped memory for tpu_custom_call.1']
    #allocation13 [shape = 'u8[512]{0}', space=vmem, size = 0x400, scoped, tag = 'input window, operand 6, single buffered']
    #allocation14 [shape = 'u8[4096]{0}', space=vmem, size = 0x1000, scoped, tag = 'output window, operand 0, single buffered']
    %12 = vsyncpa [#allocation3], 0
    %13 = vsyncpa [#allocation6], 0
    %14 = vsyncpa [#allocation9], 0
    %15 = vsyncpa [#allocation12], 0
    %16 = vsyncpa [#allocation4], 0
    // Predicated region
    $region2: #{tpu_custom_call.1} parent=1 // pred_check
      _
    $region3: #{tpu_custom_call.1} parent=1 // pred_check_branch
      %18 = sbr.rel (0) target = $region5
    $region4: #{tpu_custom_call.1} parent=1 // pred_region
      %s20 = ssub.s32 128, 128
      %21 = vsyncadd [#allocation3], %s20
      %s23 = sshll.u32 [#allocation2], 4
      %s24 = int_to_ptr.vmem [resolvable:$true] %s23
      %26 = dma.hbm_to_vmem [thread:$0]  %s0, 128, %s24, [#allocation3]
    $region5: #{tpu_custom_call.1} parent=1 // pred_fallthru
      _
    // Predicated region
    $region6: #{tpu_custom_call.1} parent=1 // pred_check
      _
    $region7: #{tpu_custom_call.1} parent=1 // pred_check_branch
      %28 = sbr.rel (0) target = $region9
    $region8: #{tpu_custom_call.1} parent=1 // pred_region
      %s30 = ssub.s32 1024, 1024
      %31 = vsyncadd [#allocation6], %s30
      %s32 = sshll.u32 [#allocation5], 4
      %s33 = int_to_ptr.vmem [resolvable:$true] %s32
      %38 = dma.hbm_to_vmem [thread:$0]  %s1, 1024, %s33, [#allocation6], 512, 512, 32
    $region9: #{tpu_custom_call.1} parent=1 // pred_fallthru
      _
    // Predicated region
    $region10: #{tpu_custom_call.1} parent=1 // pred_check
      _
    $region11: #{tpu_custom_call.1} parent=1 // pred_check_branch
      %40 = sbr.rel (0) target = $region13
    $region12: #{tpu_custom_call.1} parent=1 // pred_region
      %s42 = ssub.s32 64, 64
      %43 = vsyncadd [#allocation6], %s42
      %s45 = sshll.u32 [#allocation7], 4
      %s46 = int_to_ptr.vmem [resolvable:$true] %s45
      %48 = dma.hbm_to_vmem [thread:$0]  %s2, 64, %s46, [#allocation6]
    $region13: #{tpu_custom_call.1} parent=1 // pred_fallthru
      _
    // Predicated region
    $region14: #{tpu_custom_call.1} parent=1 // pred_check
      _
    $region15: #{tpu_custom_call.1} parent=1 // pred_check_branch
      %50 = sbr.rel (0) target = $region17
    $region16: #{tpu_custom_call.1} parent=1 // pred_region
      %s52 = ssub.s32 65536, 65536
      %53 = vsyncadd [#allocation9], %s52
      %s54 = sshll.u32 [#allocation8], 4
      %s55 = int_to_ptr.vmem [resolvable:$true] %s54
      %60 = dma.hbm_to_vmem [thread:$0]  %s3, 65536, %s55, [#allocation9], 1024, 1024, 64
    $region17: #{tpu_custom_call.1} parent=1 // pred_fallthru
      _
    // Predicated region
    $region18: #{tpu_custom_call.1} parent=1 // pred_check
      _
    $region19: #{tpu_custom_call.1} parent=1 // pred_check_branch
      %62 = sbr.rel (0) target = $region21
    $region20: #{tpu_custom_call.1} parent=1 // pred_region
      %s64 = ssub.s32 128, 128
      %65 = vsyncadd [#allocation9], %s64
      %s67 = sshll.u32 [#allocation10], 4
      %s68 = int_to_ptr.vmem [resolvable:$true] %s67
      %70 = dma.hbm_to_vmem [thread:$0]  %s4, 128, %s68, [#allocation9]
    $region21: #{tpu_custom_call.1} parent=1 // pred_fallthru
      _
    // Predicated region
    $region22: #{tpu_custom_call.1} parent=1 // pred_check
      _
    $region23: #{tpu_custom_call.1} parent=1 // pred_check_branch
      %72 = sbr.rel (0) target = $region25
    $region24: #{tpu_custom_call.1} parent=1 // pred_region
      %s74 = ssub.s32 16384, 16384
      %75 = vsyncadd [#allocation12], %s74
      %s76 = sshll.u32 [#allocation11], 4
      %s77 = int_to_ptr.vmem [resolvable:$true] %s76
      %82 = dma.hbm_to_vmem [thread:$0]  %s5, 16384, %s77, [#allocation12], 128, 128, 8
    $region25: #{tpu_custom_call.1} parent=1 // pred_fallthru
      _
    // Predicated region
    $region26: #{tpu_custom_call.1} parent=1 // pred_check
      _
    $region27: #{tpu_custom_call.1} parent=1 // pred_check_branch
      %84 = sbr.rel (0) target = $region29
    $region28: #{tpu_custom_call.1} parent=1 // pred_region
      %s86 = ssub.s32 16, 16
      %87 = vsyncadd [#allocation12], %s86
      %s89 = sshll.u32 [#allocation13], 4
      %s90 = int_to_ptr.vmem [resolvable:$true] %s89
      %92 = dma.hbm_to_vmem [thread:$0]  %s6, 16, %s90, [#allocation12]
    $region29: #{tpu_custom_call.1} parent=1 // pred_fallthru
      _
    // Predicated region
    $region30: #{tpu_custom_call.1} parent=1 // pred_check
      _
    $region31: #{tpu_custom_call.1} parent=1 // pred_check_branch
      %94 = sbr.rel (0) target = $region33
    $region32: #{tpu_custom_call.1} parent=1 // pred_region
      %95 = dma.done [#allocation3], 128
    $region33: #{tpu_custom_call.1} parent=1 // pred_fallthru
      _
    // Predicated region
    $region34: #{tpu_custom_call.1} parent=1 // pred_check
      _
    $region35: #{tpu_custom_call.1} parent=1 // pred_check_branch
      %97 = sbr.rel (0) target = $region37
    $region36: #{tpu_custom_call.1} parent=1 // pred_region
      %98 = dma.done [#allocation6], 1024
    $region37: #{tpu_custom_call.1} parent=1 // pred_fallthru
      _
    // Predicated region
    $region38: #{tpu_custom_call.1} parent=1 // pred_check
      _
    $region39: #{tpu_custom_call.1} parent=1 // pred_check_branch
      %100 = sbr.rel (0) target = $region41
    $region40: #{tpu_custom_call.1} parent=1 // pred_region
      %101 = dma.done [#allocation6], 64
    $region41: #{tpu_custom_call.1} parent=1 // pred_fallthru
      _
    // Predicated region
    $region42: #{tpu_custom_call.1} parent=1 // pred_check
      _
    $region43: #{tpu_custom_call.1} parent=1 // pred_check_branch
      %103 = sbr.rel (0) target = $region45
    $region44: #{tpu_custom_call.1} parent=1 // pred_region
      %104 = dma.done [#allocation9], 65536
    $region45: #{tpu_custom_call.1} parent=1 // pred_fallthru
      _
    // Predicated region
    $region46: #{tpu_custom_call.1} parent=1 // pred_check
      _
    $region47: #{tpu_custom_call.1} parent=1 // pred_check_branch
      %106 = sbr.rel (0) target = $region49
    $region48: #{tpu_custom_call.1} parent=1 // pred_region
      %107 = dma.done [#allocation9], 128
    $region49: #{tpu_custom_call.1} parent=1 // pred_fallthru
      _
    // Predicated region
    $region50: #{tpu_custom_call.1} parent=1 // pred_check
      _
    $region51: #{tpu_custom_call.1} parent=1 // pred_check_branch
      %109 = sbr.rel (0) target = $region53
    $region52: #{tpu_custom_call.1} parent=1 // pred_region
      %110 = dma.done [#allocation12], 16384
    $region53: #{tpu_custom_call.1} parent=1 // pred_fallthru
      _
    // Predicated region
    $region54: #{tpu_custom_call.1} parent=1 // pred_check
      _
    $region55: #{tpu_custom_call.1} parent=1 // pred_check_branch
      %112 = sbr.rel (0) target = $region57
    $region56: #{tpu_custom_call.1} parent=1 // pred_region
      %113 = dma.done [#allocation12], 16
    $region57: #{tpu_custom_call.1} parent=1 // pred_fallthru
      _
    %v114 = vld [vmem:[#allocation2] sm:$0xff]
    %v115 = vld [vmem:[#allocation5] sm:$0xff]
    %v116 = vld [vmem:[#allocation5 + $0x8] sm:$0xff]
    %v117 = vld [vmem:[#allocation5 + $0x10] sm:$0xff]
    %v118 = vld [vmem:[#allocation5 + $0x18] sm:$0xff]
    %v119 = vld [vmem:[#allocation5 + $0x20] sm:$0xff]
    %v120 = vld [vmem:[#allocation5 + $0x28] sm:$0xff]
    %v121 = vld [vmem:[#allocation5 + $0x30] sm:$0xff]
    %v122 = vld [vmem:[#allocation5 + $0x38] sm:$0xff]
    %v123 = vld [vmem:[#allocation7] sm:$0xf]
    %v125 = vlaneseq
    %v126 = vshrl.u32 %v125, 7
    %v127 = vsub.s32 0, %v126
    %v128 = vrot.slane %v123, %v127
    %v129 = vlaneseq
    %v130 = vshrl.u32 %v129, 7
    %v131 = vsub.s32 1, %v130
    %v132 = vrot.slane %v123, %v131
    %v133 = vlaneseq
    %v134 = vshrl.u32 %v133, 7
    %v135 = vsub.s32 2, %v134
    %v136 = vrot.slane %v123, %v135
    %v137 = vlaneseq
    %v138 = vshrl.u32 %v137, 7
    %v139 = vsub.s32 3, %v138
    %v140 = vrot.slane %v123, %v139
    %vm145 = vcmask 130048
    %v147 = vsel %vm145, %v114, 0
    %149 = vmatprep.subr.mxu0 %v116
    %150 = vmatpush1.msra.mxu0 %v115
    %151 = vmatprep.subr.mxu0 %v120
    %152 = vmatpush1.msra.mxu0 %v119
    %153 = vmatprep.subr.mxu0 0.0
    %154 = vmatpush1.msra.mxu0 0.0
    %155 = vmatprep.subr.mxu0 0.0
    %156 = vmatpush1.msra.mxu0 0.0
    %157 = vmatprep.subr.mxu0 0.0
    %158 = vmatpush1.msra.mxu0 0.0
    %159 = vmatprep.subr.mxu0 0.0
    %160 = vmatpush1.msra.mxu0 0.0
    %161 = vmatprep.subr.mxu0 0.0
    %162 = vmatpush1.msra.mxu0 0.0
    %163 = vmatprep.subr.mxu0 0.0
    %164 = vmatpush1.msra.mxu0 0.0
    %165 = vmatprep.subr.mxu0 0.0
    %166 = vmatpush1.msra.mxu0 0.0
    %167 = vmatprep.subr.mxu0 0.0
    %168 = vmatpush1.msra.mxu0 0.0
    %169 = vmatprep.subr.mxu0 0.0
    %170 = vmatpush1.msra.mxu0 0.0
    %171 = vmatprep.subr.mxu0 0.0
    %172 = vmatpush1.msra.mxu0 0.0
    %173 = vmatprep.subr.mxu0 0.0
    %174 = vmatpush1.msra.mxu0 0.0
    %175 = vmatprep.subr.mxu0 0.0
    %176 = vmatpush1.msra.mxu0 0.0
    %177 = vmatprep.subr.mxu0 0.0
    %178 = vmatpush1.msra.mxu0 0.0
    %179 = vmatprep.subr.mxu0 0.0
    %180 = vmatpush1.msra.mxu0 0.0
    %181 = vmatprep.subr.mxu0 0.0
    %182 = vmatpush1.msra.mxu0 0.0
    %183 = vmatprep.subr.mxu0 0.0
    %184 = vmatpush1.msra.mxu0 0.0
    %185 = vmatprep.subr.mxu0 0.0
    %186 = vmatpush1.msra.mxu0 0.0
    %187 = vmatprep.subr.mxu0 0.0
    %188 = vmatpush1.msra.mxu0 0.0
    %189 = vmatprep.subr.mxu0 0.0
    %190 = vmatpush1.msra.mxu0 0.0
    %191 = vmatprep.subr.mxu0 0.0
    %192 = vmatpush1.msra.mxu0 0.0
    %193 = vmatprep.subr.mxu0 0.0
    %194 = vmatpush1.msra.mxu0 0.0
    %195 = vmatprep.subr.mxu0 0.0
    %196 = vmatpush1.msra.mxu0 0.0
    %197 = vmatprep.subr.mxu0 0.0
    %198 = vmatpush1.msra.mxu0 0.0
    %199 = vmatprep.subr.mxu0 0.0
    %200 = vmatpush1.msra.mxu0 0.0
    %201 = vmatprep.subr.mxu0 0.0
    %202 = vmatpush1.msra.mxu0 0.0
    %203 = vmatprep.subr.mxu0 0.0
    %204 = vmatpush1.msra.mxu0 0.0
    %205 = vmatprep.subr.mxu0 0.0
    %206 = vmatpush1.msra.mxu0 0.0
    %207 = vmatprep.subr.mxu0 0.0
    %208 = vmatpush1.msra.mxu0 0.0
    %209 = vmatprep.subr.mxu0 0.0
    %210 = vmatpush1.msra.mxu0 0.0
    %211 = vmatprep.subr.mxu0 0.0
    %212 = vmatpush1.msra.mxu0 0.0
    %213 = vmatprep.mubr.f32.mxu0 0.0
    %214 = vmatmul.mubr.f32.gmra.mrb[0].mxu0 %v147
    %v215 = vpop.f32.mrb[0].mxu0
    %v216 = vadd.f32 %v128, %v215
    %v217 = vpop.f32.mrb[0].mxu0
    %v218 = vadd.f32 %v132, %v217
    %219 = vdwg.mxu0
    %220 = vmatprep.subr.mxu0 %v118
    %221 = vmatpush1.msra.mxu0 %v117
    %222 = vmatprep.subr.mxu0 %v122
    %223 = vmatpush1.msra.mxu0 %v121
    %224 = vmatprep.subr.mxu0 0.0
    %225 = vmatpush1.msra.mxu0 0.0
    %226 = vmatprep.subr.mxu0 0.0
    %227 = vmatpush1.msra.mxu0 0.0
    %228 = vmatprep.subr.mxu0 0.0
    %229 = vmatpush1.msra.mxu0 0.0
    %230 = vmatprep.subr.mxu0 0.0
    %231 = vmatpush1.msra.mxu0 0.0
    %232 = vmatprep.subr.mxu0 0.0
    %233 = vmatpush1.msra.mxu0 0.0
    %234 = vmatprep.subr.mxu0 0.0
    %235 = vmatpush1.msra.mxu0 0.0
    %236 = vmatprep.subr.mxu0 0.0
    %237 = vmatpush1.msra.mxu0 0.0
    %238 = vmatprep.subr.mxu0 0.0
    %239 = vmatpush1.msra.mxu0 0.0
    %240 = vmatprep.subr.mxu0 0.0
    %241 = vmatpush1.msra.mxu0 0.0
    %242 = vmatprep.subr.mxu0 0.0
    %243 = vmatpush1.msra.mxu0 0.0
    %244 = vmatprep.subr.mxu0 0.0
    %245 = vmatpush1.msra.mxu0 0.0
    %246 = vmatprep.subr.mxu0 0.0
    %247 = vmatpush1.msra.mxu0 0.0
    %248 = vmatprep.subr.mxu0 0.0
    %249 = vmatpush1.msra.mxu0 0.0
    %250 = vmatprep.subr.mxu0 0.0
    %251 = vmatpush1.msra.mxu0 0.0
    %252 = vmatprep.subr.mxu0 0.0
    %253 = vmatpush1.msra.mxu0 0.0
    %254 = vmatprep.subr.mxu0 0.0
    %255 = vmatpush1.msra.mxu0 0.0
    %256 = vmatprep.subr.mxu0 0.0
    %257 = vmatpush1.msra.mxu0 0.0
    %258 = vmatprep.subr.mxu0 0.0
    %259 = vmatpush1.msra.mxu0 0.0
    %260 = vmatprep.subr.mxu0 0.0
    %261 = vmatpush1.msra.mxu0 0.0
    %262 = vmatprep.subr.mxu0 0.0
    %263 = vmatpush1.msra.mxu0 0.0
    %264 = vmatprep.subr.mxu0 0.0
    %265 = vmatpush1.msra.mxu0 0.0
    %266 = vmatprep.subr.mxu0 0.0
    %267 = vmatpush1.msra.mxu0 0.0
    %268 = vmatprep.subr.mxu0 0.0
    %269 = vmatpush1.msra.mxu0 0.0
    %270 = vmatprep.subr.mxu0 0.0
    %271 = vmatpush1.msra.mxu0 0.0
    %272 = vmatprep.subr.mxu0 0.0
    %273 = vmatpush1.msra.mxu0 0.0
    %274 = vmatprep.subr.mxu0 0.0
    %275 = vmatpush1.msra.mxu0 0.0
    %276 = vmatprep.subr.mxu0 0.0
    %277 = vmatpush1.msra.mxu0 0.0
    %278 = vmatprep.subr.mxu0 0.0
    %279 = vmatpush1.msra.mxu0 0.0
    %280 = vmatprep.subr.mxu0 0.0
    %281 = vmatpush1.msra.mxu0 0.0
    %282 = vmatprep.subr.mxu0 0.0
    %283 = vmatpush1.msra.mxu0 0.0
    %284 = vmatprep.mubr.f32.mxu0 0.0
    %285 = vmatmul.mubr.f32.gmra.mrb[0].mxu0 %v147
    %v286 = vpop.f32.mrb[0].mxu0
    %v287 = vadd.f32 %v136, %v286
    %v288 = vpop.f32.mrb[0].mxu0
    %v289 = vadd.f32 %v140, %v288
    %290 = vdwg.mxu0
    %v291 = vmax.f32 %v216, 0.0
    %v292 = vmax.f32 %v218, 0.0
    %v293 = vmax.f32 %v287, 0.0
    %v294 = vmax.f32 %v289, 0.0
    %v295 = vld [vmem:[#allocation8] sm:$0xff]
    %v296 = vld [vmem:[#allocation8 + $0x8] sm:$0xff]
    %v297 = vld [vmem:[#allocation8 + $0x10] sm:$0xff]
    %v298 = vld [vmem:[#allocation8 + $0x18] sm:$0xff]
    %v299 = vld [vmem:[#allocation8 + $0x20] sm:$0xff]
    %v300 = vld [vmem:[#allocation8 + $0x28] sm:$0xff]
    %v301 = vld [vmem:[#allocation8 + $0x30] sm:$0xff]
    %v302 = vld [vmem:[#allocation8 + $0x38] sm:$0xff]
    %v303 = vld [vmem:[#allocation8 + $0x40] sm:$0xff]
    %v304 = vld [vmem:[#allocation8 + $0x48] sm:$0xff]
    %v305 = vld [vmem:[#allocation8 + $0x50] sm:$0xff]
    %v306 = vld [vmem:[#allocation8 + $0x58] sm:$0xff]
    %v307 = vld [vmem:[#allocation8 + $0x60] sm:$0xff]
    %v308 = vld [vmem:[#allocation8 + $0x68] sm:$0xff]
    %v309 = vld [vmem:[#allocation8 + $0x70] sm:$0xff]
    %v310 = vld [vmem:[#allocation8 + $0x78] sm:$0xff]
    %v311 = vld [vmem:[#allocation8 + $0x80] sm:$0xff]
    %v312 = vld [vmem:[#allocation8 + $0x88] sm:$0xff]
    %v313 = vld [vmem:[#allocation8 + $0x90] sm:$0xff]
    %v314 = vld [vmem:[#allocation8 + $0x98] sm:$0xff]
    %v315 = vld [vmem:[#allocation8 + $0xa0] sm:$0xff]
    %v316 = vld [vmem:[#allocation8 + $0xa8] sm:$0xff]
    %v317 = vld [vmem:[#allocation8 + $0xb0] sm:$0xff]
    %v318 = vld [vmem:[#allocation8 + $0xb8] sm:$0xff]
    %v319 = vld [vmem:[#allocation8 + $0xc0] sm:$0xff]
    %v320 = vld [vmem:[#allocation8 + $0xc8] sm:$0xff]
    %v321 = vld [vmem:[#allocation8 + $0xd0] sm:$0xff]
    %v322 = vld [vmem:[#allocation8 + $0xd8] sm:$0xff]
    %v323 = vld [vmem:[#allocation8 + $0xe0] sm:$0xff]
    %v324 = vld [vmem:[#allocation8 + $0xe8] sm:$0xff]
    %v325 = vld [vmem:[#allocation8 + $0xf0] sm:$0xff]
    %v326 = vld [vmem:[#allocation8 + $0xf8] sm:$0xff]
    %v327 = vld [vmem:[#allocation8 + $0x100] sm:$0xff]
    %v328 = vld [vmem:[#allocation8 + $0x108] sm:$0xff]
    %v329 = vld [vmem:[#allocation8 + $0x110] sm:$0xff]
    %v330 = vld [vmem:[#allocation8 + $0x118] sm:$0xff]
    %v331 = vld [vmem:[#allocation8 + $0x120] sm:$0xff]
    %v332 = vld [vmem:[#allocation8 + $0x128] sm:$0xff]
    %v333 = vld [vmem:[#allocation8 + $0x130] sm:$0xff]
    %v334 = vld [vmem:[#allocation8 + $0x138] sm:$0xff]
    %v335 = vld [vmem:[#allocation8 + $0x140] sm:$0xff]
    %v336 = vld [vmem:[#allocation8 + $0x148] sm:$0xff]
    %v337 = vld [vmem:[#allocation8 + $0x150] sm:$0xff]
    %v338 = vld [vmem:[#allocation8 + $0x158] sm:$0xff]
    %v339 = vld [vmem:[#allocation8 + $0x160] sm:$0xff]
    %v340 = vld [vmem:[#allocation8 + $0x168] sm:$0xff]
    %v341 = vld [vmem:[#allocation8 + $0x170] sm:$0xff]
    %v342 = vld [vmem:[#allocation8 + $0x178] sm:$0xff]
    %v343 = vld [vmem:[#allocation8 + $0x180] sm:$0xff]
    %v344 = vld [vmem:[#allocation8 + $0x188] sm:$0xff]
    %v345 = vld [vmem:[#allocation8 + $0x190] sm:$0xff]
    %v346 = vld [vmem:[#allocation8 + $0x198] sm:$0xff]
    %v347 = vld [vmem:[#allocation8 + $0x1a0] sm:$0xff]
    %v348 = vld [vmem:[#allocation8 + $0x1a8] sm:$0xff]
    %v349 = vld [vmem:[#allocation8 + $0x1b0] sm:$0xff]
    %v350 = vld [vmem:[#allocation8 + $0x1b8] sm:$0xff]
    %v351 = vld [vmem:[#allocation8 + $0x1c0] sm:$0xff]
    %v352 = vld [vmem:[#allocation8 + $0x1c8] sm:$0xff]
    %v353 = vld [vmem:[#allocation8 + $0x1d0] sm:$0xff]
    %v354 = vld [vmem:[#allocation8 + $0x1d8] sm:$0xff]
    %v355 = vld [vmem:[#allocation8 + $0x1e0] sm:$0xff]
    %v356 = vld [vmem:[#allocation8 + $0x1e8] sm:$0xff]
    %v357 = vld [vmem:[#allocation8 + $0x1f0] sm:$0xff]
    %v358 = vld [vmem:[#allocation8 + $0x1f8] sm:$0xff]
    %v359 = vld [vmem:[#allocation8 + $0x200] sm:$0xff]
    %v360 = vld [vmem:[#allocation8 + $0x208] sm:$0xff]
    %v361 = vld [vmem:[#allocation8 + $0x210] sm:$0xff]
    %v362 = vld [vmem:[#allocation8 + $0x218] sm:$0xff]
    %v363 = vld [vmem:[#allocation8 + $0x220] sm:$0xff]
    %v364 = vld [vmem:[#allocation8 + $0x228] sm:$0xff]
    %v365 = vld [vmem:[#allocation8 + $0x230] sm:$0xff]
    %v366 = vld [vmem:[#allocation8 + $0x238] sm:$0xff]
    %v367 = vld [vmem:[#allocation8 + $0x240] sm:$0xff]
    %v368 = vld [vmem:[#allocation8 + $0x248] sm:$0xff]
    %v369 = vld [vmem:[#allocation8 + $0x250] sm:$0xff]
    %v370 = vld [vmem:[#allocation8 + $0x258] sm:$0xff]
    %v371 = vld [vmem:[#allocation8 + $0x260] sm:$0xff]
    %v372 = vld [vmem:[#allocation8 + $0x268] sm:$0xff]
    %v373 = vld [vmem:[#allocation8 + $0x270] sm:$0xff]
    %v374 = vld [vmem:[#allocation8 + $0x278] sm:$0xff]
    %v375 = vld [vmem:[#allocation8 + $0x280] sm:$0xff]
    %v376 = vld [vmem:[#allocation8 + $0x288] sm:$0xff]
    %v377 = vld [vmem:[#allocation8 + $0x290] sm:$0xff]
    %v378 = vld [vmem:[#allocation8 + $0x298] sm:$0xff]
    %v379 = vld [vmem:[#allocation8 + $0x2a0] sm:$0xff]
    %v380 = vld [vmem:[#allocation8 + $0x2a8] sm:$0xff]
    %v381 = vld [vmem:[#allocation8 + $0x2b0] sm:$0xff]
    %v382 = vld [vmem:[#allocation8 + $0x2b8] sm:$0xff]
    %v383 = vld [vmem:[#allocation8 + $0x2c0] sm:$0xff]
    %v384 = vld [vmem:[#allocation8 + $0x2c8] sm:$0xff]
    %v385 = vld [vmem:[#allocation8 + $0x2d0] sm:$0xff]
    %v386 = vld [vmem:[#allocation8 + $0x2d8] sm:$0xff]
    %v387 = vld [vmem:[#allocation8 + $0x2e0] sm:$0xff]
    %v388 = vld [vmem:[#allocation8 + $0x2e8] sm:$0xff]
    %v389 = vld [vmem:[#allocation8 + $0x2f0] sm:$0xff]
    %v390 = vld [vmem:[#allocation8 + $0x2f8] sm:$0xff]
    %v391 = vld [vmem:[#allocation8 + $0x300] sm:$0xff]
    %v392 = vld [vmem:[#allocation8 + $0x308] sm:$0xff]
    %v393 = vld [vmem:[#allocation8 + $0x310] sm:$0xff]
    %v394 = vld [vmem:[#allocation8 + $0x318] sm:$0xff]
    %v395 = vld [vmem:[#allocation8 + $0x320] sm:$0xff]
    %v396 = vld [vmem:[#allocation8 + $0x328] sm:$0xff]
    %v397 = vld [vmem:[#allocation8 + $0x330] sm:$0xff]
    %v398 = vld [vmem:[#allocation8 + $0x338] sm:$0xff]
    %v399 = vld [vmem:[#allocation8 + $0x340] sm:$0xff]
    %v400 = vld [vmem:[#allocation8 + $0x348] sm:$0xff]
    %v401 = vld [vmem:[#allocation8 + $0x350] sm:$0xff]
    %v402 = vld [vmem:[#allocation8 + $0x358] sm:$0xff]
    %v403 = vld [vmem:[#allocation8 + $0x360] sm:$0xff]
    %v404 = vld [vmem:[#allocation8 + $0x368] sm:$0xff]
    %v405 = vld [vmem:[#allocation8 + $0x370] sm:$0xff]
    %v406 = vld [vmem:[#allocation8 + $0x378] sm:$0xff]
    %v407 = vld [vmem:[#allocation8 + $0x380] sm:$0xff]
    %v408 = vld [vmem:[#allocation8 + $0x388] sm:$0xff]
    %v409 = vld [vmem:[#allocation8 + $0x390] sm:$0xff]
    %v410 = vld [vmem:[#allocation8 + $0x398] sm:$0xff]
    %v411 = vld [vmem:[#allocation8 + $0x3a0] sm:$0xff]
    %v412 = vld [vmem:[#allocation8 + $0x3a8] sm:$0xff]
    %v413 = vld [vmem:[#allocation8 + $0x3b0] sm:$0xff]
    %v414 = vld [vmem:[#allocation8 + $0x3b8] sm:$0xff]
    %v415 = vld [vmem:[#allocation8 + $0x3c0] sm:$0xff]
    %v416 = vld [vmem:[#allocation8 + $0x3c8] sm:$0xff]
    %v417 = vld [vmem:[#allocation8 + $0x3d0] sm:$0xff]
    %v418 = vld [vmem:[#allocation8 + $0x3d8] sm:$0xff]
    %v419 = vld [vmem:[#allocation8 + $0x3e0] sm:$0xff]
    %v420 = vld [vmem:[#allocation8 + $0x3e8] sm:$0xff]
    %v421 = vld [vmem:[#allocation8 + $0x3f0] sm:$0xff]
    %v422 = vld [vmem:[#allocation8 + $0x3f8] sm:$0xff]
    %v423 = vld [vmem:[#allocation8 + $0x400] sm:$0xff]
    %v424 = vld [vmem:[#allocation8 + $0x408] sm:$0xff]
    %v425 = vld [vmem:[#allocation8 + $0x410] sm:$0xff]
    %v426 = vld [vmem:[#allocation8 + $0x418] sm:$0xff]
    %v427 = vld [vmem:[#allocation8 + $0x420] sm:$0xff]
    %v428 = vld [vmem:[#allocation8 + $0x428] sm:$0xff]
    %v429 = vld [vmem:[#allocation8 + $0x430] sm:$0xff]
    %v430 = vld [vmem:[#allocation8 + $0x438] sm:$0xff]
    %v431 = vld [vmem:[#allocation8 + $0x440] sm:$0xff]
    %v432 = vld [vmem:[#allocation8 + $0x448] sm:$0xff]
    %v433 = vld [vmem:[#allocation8 + $0x450] sm:$0xff]
    %v434 = vld [vmem:[#allocation8 + $0x458] sm:$0xff]
    %v435 = vld [vmem:[#allocation8 + $0x460] sm:$0xff]
    %v436 = vld [vmem:[#allocation8 + $0x468] sm:$0xff]
    %v437 = vld [vmem:[#allocation8 + $0x470] sm:$0xff]
    %v438 = vld [vmem:[#allocation8 + $0x478] sm:$0xff]
    %v439 = vld [vmem:[#allocation8 + $0x480] sm:$0xff]
    %v440 = vld [vmem:[#allocation8 + $0x488] sm:$0xff]
    %v441 = vld [vmem:[#allocation8 + $0x490] sm:$0xff]
    %v442 = vld [vmem:[#allocation8 + $0x498] sm:$0xff]
    %v443 = vld [vmem:[#allocation8 + $0x4a0] sm:$0xff]
    %v444 = vld [vmem:[#allocation8 + $0x4a8] sm:$0xff]
    %v445 = vld [vmem:[#allocation8 + $0x4b0] sm:$0xff]
    %v446 = vld [vmem:[#allocation8 + $0x4b8] sm:$0xff]
    %v447 = vld [vmem:[#allocation8 + $0x4c0] sm:$0xff]
    %v448 = vld [vmem:[#allocation8 + $0x4c8] sm:$0xff]
    %v449 = vld [vmem:[#allocation8 + $0x4d0] sm:$0xff]
    %v450 = vld [vmem:[#allocation8 + $0x4d8] sm:$0xff]
    %v451 = vld [vmem:[#allocation8 + $0x4e0] sm:$0xff]
    %v452 = vld [vmem:[#allocation8 + $0x4e8] sm:$0xff]
    %v453 = vld [vmem:[#allocation8 + $0x4f0] sm:$0xff]
    %v454 = vld [vmem:[#allocation8 + $0x4f8] sm:$0xff]
    %v455 = vld [vmem:[#allocation8 + $0x500] sm:$0xff]
    %v456 = vld [vmem:[#allocation8 + $0x508] sm:$0xff]
    %v457 = vld [vmem:[#allocation8 + $0x510] sm:$0xff]
    %v458 = vld [vmem:[#allocation8 + $0x518] sm:$0xff]
    %v459 = vld [vmem:[#allocation8 + $0x520] sm:$0xff]
    %v460 = vld [vmem:[#allocation8 + $0x528] sm:$0xff]
    %v461 = vld [vmem:[#allocation8 + $0x530] sm:$0xff]
    %v462 = vld [vmem:[#allocation8 + $0x538] sm:$0xff]
    %v463 = vld [vmem:[#allocation8 + $0x540] sm:$0xff]
    %v464 = vld [vmem:[#allocation8 + $0x548] sm:$0xff]
    %v465 = vld [vmem:[#allocation8 + $0x550] sm:$0xff]
    %v466 = vld [vmem:[#allocation8 + $0x558] sm:$0xff]
    %v467 = vld [vmem:[#allocation8 + $0x560] sm:$0xff]
    %v468 = vld [vmem:[#allocation8 + $0x568] sm:$0xff]
    %v469 = vld [vmem:[#allocation8 + $0x570] sm:$0xff]
    %v470 = vld [vmem:[#allocation8 + $0x578] sm:$0xff]
    %v471 = vld [vmem:[#allocation8 + $0x580] sm:$0xff]
    %v472 = vld [vmem:[#allocation8 + $0x588] sm:$0xff]
    %v473 = vld [vmem:[#allocation8 + $0x590] sm:$0xff]
    %v474 = vld [vmem:[#allocation8 + $0x598] sm:$0xff]
    %v475 = vld [vmem:[#allocation8 + $0x5a0] sm:$0xff]
    %v476 = vld [vmem:[#allocation8 + $0x5a8] sm:$0xff]
    %v477 = vld [vmem:[#allocation8 + $0x5b0] sm:$0xff]
    %v478 = vld [vmem:[#allocation8 + $0x5b8] sm:$0xff]
    %v479 = vld [vmem:[#allocation8 + $0x5c0] sm:$0xff]
    %v480 = vld [vmem:[#allocation8 + $0x5c8] sm:$0xff]
    %v481 = vld [vmem:[#allocation8 + $0x5d0] sm:$0xff]
    %v482 = vld [vmem:[#allocation8 + $0x5d8] sm:$0xff]
    %v483 = vld [vmem:[#allocation8 + $0x5e0] sm:$0xff]
    %v484 = vld [vmem:[#allocation8 + $0x5e8] sm:$0xff]
    %v485 = vld [vmem:[#allocation8 + $0x5f0] sm:$0xff]
    %v486 = vld [vmem:[#allocation8 + $0x5f8] sm:$0xff]
    %v487 = vld [vmem:[#allocation8 + $0x600] sm:$0xff]
    %v488 = vld [vmem:[#allocation8 + $0x608] sm:$0xff]
    %v489 = vld [vmem:[#allocation8 + $0x610] sm:$0xff]
    %v490 = vld [vmem:[#allocation8 + $0x618] sm:$0xff]
    %v491 = vld [vmem:[#allocation8 + $0x620] sm:$0xff]
    %v492 = vld [vmem:[#allocation8 + $0x628] sm:$0xff]
    %v493 = vld [vmem:[#allocation8 + $0x630] sm:$0xff]
    %v494 = vld [vmem:[#allocation8 + $0x638] sm:$0xff]
    %v495 = vld [vmem:[#allocation8 + $0x640] sm:$0xff]
    %v496 = vld [vmem:[#allocation8 + $0x648] sm:$0xff]
    %v497 = vld [vmem:[#allocation8 + $0x650] sm:$0xff]
    %v498 = vld [vmem:[#allocation8 + $0x658] sm:$0xff]
    %v499 = vld [vmem:[#allocation8 + $0x660] sm:$0xff]
    %v500 = vld [vmem:[#allocation8 + $0x668] sm:$0xff]
    %v501 = vld [vmem:[#allocation8 + $0x670] sm:$0xff]
    %v502 = vld [vmem:[#allocation8 + $0x678] sm:$0xff]
    %v503 = vld [vmem:[#allocation8 + $0x680] sm:$0xff]
    %v504 = vld [vmem:[#allocation8 + $0x688] sm:$0xff]
    %v505 = vld [vmem:[#allocation8 + $0x690] sm:$0xff]
    %v506 = vld [vmem:[#allocation8 + $0x698] sm:$0xff]
    %v507 = vld [vmem:[#allocation8 + $0x6a0] sm:$0xff]
    %v508 = vld [vmem:[#allocation8 + $0x6a8] sm:$0xff]
    %v509 = vld [vmem:[#allocation8 + $0x6b0] sm:$0xff]
    %v510 = vld [vmem:[#allocation8 + $0x6b8] sm:$0xff]
    %v511 = vld [vmem:[#allocation8 + $0x6c0] sm:$0xff]
    %v512 = vld [vmem:[#allocation8 + $0x6c8] sm:$0xff]
    %v513 = vld [vmem:[#allocation8 + $0x6d0] sm:$0xff]
    %v514 = vld [vmem:[#allocation8 + $0x6d8] sm:$0xff]
    %v515 = vld [vmem:[#allocation8 + $0x6e0] sm:$0xff]
    %v516 = vld [vmem:[#allocation8 + $0x6e8] sm:$0xff]
    %v517 = vld [vmem:[#allocation8 + $0x6f0] sm:$0xff]
    %v518 = vld [vmem:[#allocation8 + $0x6f8] sm:$0xff]
    %v519 = vld [vmem:[#allocation8 + $0x700] sm:$0xff]
    %v520 = vld [vmem:[#allocation8 + $0x708] sm:$0xff]
    %v521 = vld [vmem:[#allocation8 + $0x710] sm:$0xff]
    %v522 = vld [vmem:[#allocation8 + $0x718] sm:$0xff]
    %v523 = vld [vmem:[#allocation8 + $0x720] sm:$0xff]
    %v524 = vld [vmem:[#allocation8 + $0x728] sm:$0xff]
    %v525 = vld [vmem:[#allocation8 + $0x730] sm:$0xff]
    %v526 = vld [vmem:[#allocation8 + $0x738] sm:$0xff]
    %v527 = vld [vmem:[#allocation8 + $0x740] sm:$0xff]
    %v528 = vld [vmem:[#allocation8 + $0x748] sm:$0xff]
    %v529 = vld [vmem:[#allocation8 + $0x750] sm:$0xff]
    %v530 = vld [vmem:[#allocation8 + $0x758] sm:$0xff]
    %v531 = vld [vmem:[#allocation8 + $0x760] sm:$0xff]
    %v532 = vld [vmem:[#allocation8 + $0x768] sm:$0xff]
    %v533 = vld [vmem:[#allocation8 + $0x770] sm:$0xff]
    %v534 = vld [vmem:[#allocation8 + $0x778] sm:$0xff]
    %v535 = vld [vmem:[#allocation8 + $0x780] sm:$0xff]
    %v536 = vld [vmem:[#allocation8 + $0x788] sm:$0xff]
    %v537 = vld [vmem:[#allocation8 + $0x790] sm:$0xff]
    %v538 = vld [vmem:[#allocation8 + $0x798] sm:$0xff]
    %v539 = vld [vmem:[#allocation8 + $0x7a0] sm:$0xff]
    %v540 = vld [vmem:[#allocation8 + $0x7a8] sm:$0xff]
    %v541 = vld [vmem:[#allocation8 + $0x7b0] sm:$0xff]
    %v542 = vld [vmem:[#allocation8 + $0x7b8] sm:$0xff]
    %v543 = vld [vmem:[#allocation8 + $0x7c0] sm:$0xff]
    %v544 = vld [vmem:[#allocation8 + $0x7c8] sm:$0xff]
    %v545 = vld [vmem:[#allocation8 + $0x7d0] sm:$0xff]
    %v546 = vld [vmem:[#allocation8 + $0x7d8] sm:$0xff]
    %v547 = vld [vmem:[#allocation8 + $0x7e0] sm:$0xff]
    %v548 = vld [vmem:[#allocation8 + $0x7e8] sm:$0xff]
    %v549 = vld [vmem:[#allocation8 + $0x7f0] sm:$0xff]
    %v550 = vld [vmem:[#allocation8 + $0x7f8] sm:$0xff]
    %v551 = vld [vmem:[#allocation8 + $0x800] sm:$0xff]
    %v552 = vld [vmem:[#allocation8 + $0x808] sm:$0xff]
    %v553 = vld [vmem:[#allocation8 + $0x810] sm:$0xff]
    %v554 = vld [vmem:[#allocation8 + $0x818] sm:$0xff]
    %v555 = vld [vmem:[#allocation8 + $0x820] sm:$0xff]
    %v556 = vld [vmem:[#allocation8 + $0x828] sm:$0xff]
    %v557 = vld [vmem:[#allocation8 + $0x830] sm:$0xff]
    %v558 = vld [vmem:[#allocation8 + $0x838] sm:$0xff]
    %v559 = vld [vmem:[#allocation8 + $0x840] sm:$0xff]
    %v560 = vld [vmem:[#allocation8 + $0x848] sm:$0xff]
    %v561 = vld [vmem:[#allocation8 + $0x850] sm:$0xff]
    %v562 = vld [vmem:[#allocation8 + $0x858] sm:$0xff]
    %v563 = vld [vmem:[#allocation8 + $0x860] sm:$0xff]
    %v564 = vld [vmem:[#allocation8 + $0x868] sm:$0xff]
    %v565 = vld [vmem:[#allocation8 + $0x870] sm:$0xff]
    %v566 = vld [vmem:[#allocation8 + $0x878] sm:$0xff]
    %v567 = vld [vmem:[#allocation8 + $0x880] sm:$0xff]
    %v568 = vld [vmem:[#allocation8 + $0x888] sm:$0xff]
    %v569 = vld [vmem:[#allocation8 + $0x890] sm:$0xff]
    %v570 = vld [vmem:[#allocation8 + $0x898] sm:$0xff]
    %v571 = vld [vmem:[#allocation8 + $0x8a0] sm:$0xff]
    %v572 = vld [vmem:[#allocation8 + $0x8a8] sm:$0xff]
    %v573 = vld [vmem:[#allocation8 + $0x8b0] sm:$0xff]
    %v574 = vld [vmem:[#allocation8 + $0x8b8] sm:$0xff]
    %v575 = vld [vmem:[#allocation8 + $0x8c0] sm:$0xff]
    %v576 = vld [vmem:[#allocation8 + $0x8c8] sm:$0xff]
    %v577 = vld [vmem:[#allocation8 + $0x8d0] sm:$0xff]
    %v578 = vld [vmem:[#allocation8 + $0x8d8] sm:$0xff]
    %v579 = vld [vmem:[#allocation8 + $0x8e0] sm:$0xff]
    %v580 = vld [vmem:[#allocation8 + $0x8e8] sm:$0xff]
    %v581 = vld [vmem:[#allocation8 + $0x8f0] sm:$0xff]
    %v582 = vld [vmem:[#allocation8 + $0x8f8] sm:$0xff]
    %v583 = vld [vmem:[#allocation8 + $0x900] sm:$0xff]
    %v584 = vld [vmem:[#allocation8 + $0x908] sm:$0xff]
    %v585 = vld [vmem:[#allocation8 + $0x910] sm:$0xff]
    %v586 = vld [vmem:[#allocation8 + $0x918] sm:$0xff]
    %v587 = vld [vmem:[#allocation8 + $0x920] sm:$0xff]
    %v588 = vld [vmem:[#allocation8 + $0x928] sm:$0xff]
    %v589 = vld [vmem:[#allocation8 + $0x930] sm:$0xff]
    %v590 = vld [vmem:[#allocation8 + $0x938] sm:$0xff]
    %v591 = vld [vmem:[#allocation8 + $0x940] sm:$0xff]
    %v592 = vld [vmem:[#allocation8 + $0x948] sm:$0xff]
    %v593 = vld [vmem:[#allocation8 + $0x950] sm:$0xff]
    %v594 = vld [vmem:[#allocation8 + $0x958] sm:$0xff]
    %v595 = vld [vmem:[#allocation8 + $0x960] sm:$0xff]
    %v596 = vld [vmem:[#allocation8 + $0x968] sm:$0xff]
    %v597 = vld [vmem:[#allocation8 + $0x970] sm:$0xff]
    %v598 = vld [vmem:[#allocation8 + $0x978] sm:$0xff]
    %v599 = vld [vmem:[#allocation8 + $0x980] sm:$0xff]
    %v600 = vld [vmem:[#allocation8 + $0x988] sm:$0xff]
    %v601 = vld [vmem:[#allocation8 + $0x990] sm:$0xff]
    %v602 = vld [vmem:[#allocation8 + $0x998] sm:$0xff]
    %v603 = vld [vmem:[#allocation8 + $0x9a0] sm:$0xff]
    %v604 = vld [vmem:[#allocation8 + $0x9a8] sm:$0xff]
    %v605 = vld [vmem:[#allocation8 + $0x9b0] sm:$0xff]
    %v606 = vld [vmem:[#allocation8 + $0x9b8] sm:$0xff]
    %v607 = vld [vmem:[#allocation8 + $0x9c0] sm:$0xff]
    %v608 = vld [vmem:[#allocation8 + $0x9c8] sm:$0xff]
    %v609 = vld [vmem:[#allocation8 + $0x9d0] sm:$0xff]
    %v610 = vld [vmem:[#allocation8 + $0x9d8] sm:$0xff]
    %v611 = vld [vmem:[#allocation8 + $0x9e0] sm:$0xff]
    %v612 = vld [vmem:[#allocation8 + $0x9e8] sm:$0xff]
    %v613 = vld [vmem:[#allocation8 + $0x9f0] sm:$0xff]
    %v614 = vld [vmem:[#allocation8 + $0x9f8] sm:$0xff]
    %v615 = vld [vmem:[#allocation8 + $0xa00] sm:$0xff]
    %v616 = vld [vmem:[#allocation8 + $0xa08] sm:$0xff]
    %v617 = vld [vmem:[#allocation8 + $0xa10] sm:$0xff]
    %v618 = vld [vmem:[#allocation8 + $0xa18] sm:$0xff]
    %v619 = vld [vmem:[#allocation8 + $0xa20] sm:$0xff]
    %v620 = vld [vmem:[#allocation8 + $0xa28] sm:$0xff]
    %v621 = vld [vmem:[#allocation8 + $0xa30] sm:$0xff]
    %v622 = vld [vmem:[#allocation8 + $0xa38] sm:$0xff]
    %v623 = vld [vmem:[#allocation8 + $0xa40] sm:$0xff]
    %v624 = vld [vmem:[#allocation8 + $0xa48] sm:$0xff]
    %v625 = vld [vmem:[#allocation8 + $0xa50] sm:$0xff]
    %v626 = vld [vmem:[#allocation8 + $0xa58] sm:$0xff]
    %v627 = vld [vmem:[#allocation8 + $0xa60] sm:$0xff]
    %v628 = vld [vmem:[#allocation8 + $0xa68] sm:$0xff]
    %v629 = vld [vmem:[#allocation8 + $0xa70] sm:$0xff]
    %v630 = vld [vmem:[#allocation8 + $0xa78] sm:$0xff]
    %v631 = vld [vmem:[#allocation8 + $0xa80] sm:$0xff]
    %v632 = vld [vmem:[#allocation8 + $0xa88] sm:$0xff]
    %v633 = vld [vmem:[#allocation8 + $0xa90] sm:$0xff]
    %v634 = vld [vmem:[#allocation8 + $0xa98] sm:$0xff]
    %v635 = vld [vmem:[#allocation8 + $0xaa0] sm:$0xff]
    %v636 = vld [vmem:[#allocation8 + $0xaa8] sm:$0xff]
    %v637 = vld [vmem:[#allocation8 + $0xab0] sm:$0xff]
    %v638 = vld [vmem:[#allocation8 + $0xab8] sm:$0xff]
    %v639 = vld [vmem:[#allocation8 + $0xac0] sm:$0xff]
    %v640 = vld [vmem:[#allocation8 + $0xac8] sm:$0xff]
    %v641 = vld [vmem:[#allocation8 + $0xad0] sm:$0xff]
    %v642 = vld [vmem:[#allocation8 + $0xad8] sm:$0xff]
    %v643 = vld [vmem:[#allocation8 + $0xae0] sm:$0xff]
    %v644 = vld [vmem:[#allocation8 + $0xae8] sm:$0xff]
    %v645 = vld [vmem:[#allocation8 + $0xaf0] sm:$0xff]
    %v646 = vld [vmem:[#allocation8 + $0xaf8] sm:$0xff]
    %v647 = vld [vmem:[#allocation8 + $0xb00] sm:$0xff]
    %v648 = vld [vmem:[#allocation8 + $0xb08] sm:$0xff]
    %v649 = vld [vmem:[#allocation8 + $0xb10] sm:$0xff]
    %v650 = vld [vmem:[#allocation8 + $0xb18] sm:$0xff]
    %v651 = vld [vmem:[#allocation8 + $0xb20] sm:$0xff]
    %v652 = vld [vmem:[#allocation8 + $0xb28] sm:$0xff]
    %v653 = vld [vmem:[#allocation8 + $0xb30] sm:$0xff]
    %v654 = vld [vmem:[#allocation8 + $0xb38] sm:$0xff]
    %v655 = vld [vmem:[#allocation8 + $0xb40] sm:$0xff]
    %v656 = vld [vmem:[#allocation8 + $0xb48] sm:$0xff]
    %v657 = vld [vmem:[#allocation8 + $0xb50] sm:$0xff]
    %v658 = vld [vmem:[#allocation8 + $0xb58] sm:$0xff]
    %v659 = vld [vmem:[#allocation8 + $0xb60] sm:$0xff]
    %v660 = vld [vmem:[#allocation8 + $0xb68] sm:$0xff]
    %v661 = vld [vmem:[#allocation8 + $0xb70] sm:$0xff]
    %v662 = vld [vmem:[#allocation8 + $0xb78] sm:$0xff]
    %v663 = vld [vmem:[#allocation8 + $0xb80] sm:$0xff]
    %v664 = vld [vmem:[#allocation8 + $0xb88] sm:$0xff]
    %v665 = vld [vmem:[#allocation8 + $0xb90] sm:$0xff]
    %v666 = vld [vmem:[#allocation8 + $0xb98] sm:$0xff]
    %v667 = vld [vmem:[#allocation8 + $0xba0] sm:$0xff]
    %v668 = vld [vmem:[#allocation8 + $0xba8] sm:$0xff]
    %v669 = vld [vmem:[#allocation8 + $0xbb0] sm:$0xff]
    %v670 = vld [vmem:[#allocation8 + $0xbb8] sm:$0xff]
    %v671 = vld [vmem:[#allocation8 + $0xbc0] sm:$0xff]
    %v672 = vld [vmem:[#allocation8 + $0xbc8] sm:$0xff]
    %v673 = vld [vmem:[#allocation8 + $0xbd0] sm:$0xff]
    %v674 = vld [vmem:[#allocation8 + $0xbd8] sm:$0xff]
    %v675 = vld [vmem:[#allocation8 + $0xbe0] sm:$0xff]
    %v676 = vld [vmem:[#allocation8 + $0xbe8] sm:$0xff]
    %v677 = vld [vmem:[#allocation8 + $0xbf0] sm:$0xff]
    %v678 = vld [vmem:[#allocation8 + $0xbf8] sm:$0xff]
    %v679 = vld [vmem:[#allocation8 + $0xc00] sm:$0xff]
    %v680 = vld [vmem:[#allocation8 + $0xc08] sm:$0xff]
    %v681 = vld [vmem:[#allocation8 + $0xc10] sm:$0xff]
    %v682 = vld [vmem:[#allocation8 + $0xc18] sm:$0xff]
    %v683 = vld [vmem:[#allocation8 + $0xc20] sm:$0xff]
    %v684 = vld [vmem:[#allocation8 + $0xc28] sm:$0xff]
    %v685 = vld [vmem:[#allocation8 + $0xc30] sm:$0xff]
    %v686 = vld [vmem:[#allocation8 + $0xc38] sm:$0xff]
    %v687 = vld [vmem:[#allocation8 + $0xc40] sm:$0xff]
    %v688 = vld [vmem:[#allocation8 + $0xc48] sm:$0xff]
    %v689 = vld [vmem:[#allocation8 + $0xc50] sm:$0xff]
    %v690 = vld [vmem:[#allocation8 + $0xc58] sm:$0xff]
    %v691 = vld [vmem:[#allocation8 + $0xc60] sm:$0xff]
    %v692 = vld [vmem:[#allocation8 + $0xc68] sm:$0xff]
    %v693 = vld [vmem:[#allocation8 + $0xc70] sm:$0xff]
    %v694 = vld [vmem:[#allocation8 + $0xc78] sm:$0xff]
    %v695 = vld [vmem:[#allocation8 + $0xc80] sm:$0xff]
    %v696 = vld [vmem:[#allocation8 + $0xc88] sm:$0xff]
    %v697 = vld [vmem:[#allocation8 + $0xc90] sm:$0xff]
    %v698 = vld [vmem:[#allocation8 + $0xc98] sm:$0xff]
    %v699 = vld [vmem:[#allocation8 + $0xca0] sm:$0xff]
    %v700 = vld [vmem:[#allocation8 + $0xca8] sm:$0xff]
    %v701 = vld [vmem:[#allocation8 + $0xcb0] sm:$0xff]
    %v702 = vld [vmem:[#allocation8 + $0xcb8] sm:$0xff]
    %v703 = vld [vmem:[#allocation8 + $0xcc0] sm:$0xff]
    %v704 = vld [vmem:[#allocation8 + $0xcc8] sm:$0xff]
    %v705 = vld [vmem:[#allocation8 + $0xcd0] sm:$0xff]
    %v706 = vld [vmem:[#allocation8 + $0xcd8] sm:$0xff]
    %v707 = vld [vmem:[#allocation8 + $0xce0] sm:$0xff]
    %v708 = vld [vmem:[#allocation8 + $0xce8] sm:$0xff]
    %v709 = vld [vmem:[#allocation8 + $0xcf0] sm:$0xff]
    %v710 = vld [vmem:[#allocation8 + $0xcf8] sm:$0xff]
    %v711 = vld [vmem:[#allocation8 + $0xd00] sm:$0xff]
    %v712 = vld [vmem:[#allocation8 + $0xd08] sm:$0xff]
    %v713 = vld [vmem:[#allocation8 + $0xd10] sm:$0xff]
    %v714 = vld [vmem:[#allocation8 + $0xd18] sm:$0xff]
    %v715 = vld [vmem:[#allocation8 + $0xd20] sm:$0xff]
    %v716 = vld [vmem:[#allocation8 + $0xd28] sm:$0xff]
    %v717 = vld [vmem:[#allocation8 + $0xd30] sm:$0xff]
    %v718 = vld [vmem:[#allocation8 + $0xd38] sm:$0xff]
    %v719 = vld [vmem:[#allocation8 + $0xd40] sm:$0xff]
    %v720 = vld [vmem:[#allocation8 + $0xd48] sm:$0xff]
    %v721 = vld [vmem:[#allocation8 + $0xd50] sm:$0xff]
    %v722 = vld [vmem:[#allocation8 + $0xd58] sm:$0xff]
    %v723 = vld [vmem:[#allocation8 + $0xd60] sm:$0xff]
    %v724 = vld [vmem:[#allocation8 + $0xd68] sm:$0xff]
    %v725 = vld [vmem:[#allocation8 + $0xd70] sm:$0xff]
    %v726 = vld [vmem:[#allocation8 + $0xd78] sm:$0xff]
    %v727 = vld [vmem:[#allocation8 + $0xd80] sm:$0xff]
    %v728 = vld [vmem:[#allocation8 + $0xd88] sm:$0xff]
    %v729 = vld [vmem:[#allocation8 + $0xd90] sm:$0xff]
    %v730 = vld [vmem:[#allocation8 + $0xd98] sm:$0xff]
    %v731 = vld [vmem:[#allocation8 + $0xda0] sm:$0xff]
    %v732 = vld [vmem:[#allocation8 + $0xda8] sm:$0xff]
    %v733 = vld [vmem:[#allocation8 + $0xdb0] sm:$0xff]
    %v734 = vld [vmem:[#allocation8 + $0xdb8] sm:$0xff]
    %v735 = vld [vmem:[#allocation8 + $0xdc0] sm:$0xff]
    %v736 = vld [vmem:[#allocation8 + $0xdc8] sm:$0xff]
    %v737 = vld [vmem:[#allocation8 + $0xdd0] sm:$0xff]
    %v738 = vld [vmem:[#allocation8 + $0xdd8] sm:$0xff]
    %v739 = vld [vmem:[#allocation8 + $0xde0] sm:$0xff]
    %v740 = vld [vmem:[#allocation8 + $0xde8] sm:$0xff]
    %v741 = vld [vmem:[#allocation8 + $0xdf0] sm:$0xff]
    %v742 = vld [vmem:[#allocation8 + $0xdf8] sm:$0xff]
    %v743 = vld [vmem:[#allocation8 + $0xe00] sm:$0xff]
    %v744 = vld [vmem:[#allocation8 + $0xe08] sm:$0xff]
    %v745 = vld [vmem:[#allocation8 + $0xe10] sm:$0xff]
    %v746 = vld [vmem:[#allocation8 + $0xe18] sm:$0xff]
    %v747 = vld [vmem:[#allocation8 + $0xe20] sm:$0xff]
    %v748 = vld [vmem:[#allocation8 + $0xe28] sm:$0xff]
    %v749 = vld [vmem:[#allocation8 + $0xe30] sm:$0xff]
    %v750 = vld [vmem:[#allocation8 + $0xe38] sm:$0xff]
    %v751 = vld [vmem:[#allocation8 + $0xe40] sm:$0xff]
    %v752 = vld [vmem:[#allocation8 + $0xe48] sm:$0xff]
    %v753 = vld [vmem:[#allocation8 + $0xe50] sm:$0xff]
    %v754 = vld [vmem:[#allocation8 + $0xe58] sm:$0xff]
    %v755 = vld [vmem:[#allocation8 + $0xe60] sm:$0xff]
    %v756 = vld [vmem:[#allocation8 + $0xe68] sm:$0xff]
    %v757 = vld [vmem:[#allocation8 + $0xe70] sm:$0xff]
    %v758 = vld [vmem:[#allocation8 + $0xe78] sm:$0xff]
    %v759 = vld [vmem:[#allocation8 + $0xe80] sm:$0xff]
    %v760 = vld [vmem:[#allocation8 + $0xe88] sm:$0xff]
    %v761 = vld [vmem:[#allocation8 + $0xe90] sm:$0xff]
    %v762 = vld [vmem:[#allocation8 + $0xe98] sm:$0xff]
    %v763 = vld [vmem:[#allocation8 + $0xea0] sm:$0xff]
    %v764 = vld [vmem:[#allocation8 + $0xea8] sm:$0xff]
    %v765 = vld [vmem:[#allocation8 + $0xeb0] sm:$0xff]
    %v766 = vld [vmem:[#allocation8 + $0xeb8] sm:$0xff]
    %v767 = vld [vmem:[#allocation8 + $0xec0] sm:$0xff]
    %v768 = vld [vmem:[#allocation8 + $0xec8] sm:$0xff]
    %v769 = vld [vmem:[#allocation8 + $0xed0] sm:$0xff]
    %v770 = vld [vmem:[#allocation8 + $0xed8] sm:$0xff]
    %v771 = vld [vmem:[#allocation8 + $0xee0] sm:$0xff]
    %v772 = vld [vmem:[#allocation8 + $0xee8] sm:$0xff]
    %v773 = vld [vmem:[#allocation8 + $0xef0] sm:$0xff]
    %v774 = vld [vmem:[#allocation8 + $0xef8] sm:$0xff]
    %v775 = vld [vmem:[#allocation8 + $0xf00] sm:$0xff]
    %v776 = vld [vmem:[#allocation8 + $0xf08] sm:$0xff]
    %v777 = vld [vmem:[#allocation8 + $0xf10] sm:$0xff]
    %v778 = vld [vmem:[#allocation8 + $0xf18] sm:$0xff]
    %v779 = vld [vmem:[#allocation8 + $0xf20] sm:$0xff]
    %v780 = vld [vmem:[#allocation8 + $0xf28] sm:$0xff]
    %v781 = vld [vmem:[#allocation8 + $0xf30] sm:$0xff]
    %v782 = vld [vmem:[#allocation8 + $0xf38] sm:$0xff]
    %v783 = vld [vmem:[#allocation8 + $0xf40] sm:$0xff]
    %v784 = vld [vmem:[#allocation8 + $0xf48] sm:$0xff]
    %v785 = vld [vmem:[#allocation8 + $0xf50] sm:$0xff]
    %v786 = vld [vmem:[#allocation8 + $0xf58] sm:$0xff]
    %v787 = vld [vmem:[#allocation8 + $0xf60] sm:$0xff]
    %v788 = vld [vmem:[#allocation8 + $0xf68] sm:$0xff]
    %v789 = vld [vmem:[#allocation8 + $0xf70] sm:$0xff]
    %v790 = vld [vmem:[#allocation8 + $0xf78] sm:$0xff]
    %v791 = vld [vmem:[#allocation8 + $0xf80] sm:$0xff]
    %v792 = vld [vmem:[#allocation8 + $0xf88] sm:$0xff]
    %v793 = vld [vmem:[#allocation8 + $0xf90] sm:$0xff]
    %v794 = vld [vmem:[#allocation8 + $0xf98] sm:$0xff]
    %v795 = vld [vmem:[#allocation8 + $0xfa0] sm:$0xff]
    %v796 = vld [vmem:[#allocation8 + $0xfa8] sm:$0xff]
    %v797 = vld [vmem:[#allocation8 + $0xfb0] sm:$0xff]
    %v798 = vld [vmem:[#allocation8 + $0xfb8] sm:$0xff]
    %v799 = vld [vmem:[#allocation8 + $0xfc0] sm:$0xff]
    %v800 = vld [vmem:[#allocation8 + $0xfc8] sm:$0xff]
    %v801 = vld [vmem:[#allocation8 + $0xfd0] sm:$0xff]
    %v802 = vld [vmem:[#allocation8 + $0xfd8] sm:$0xff]
    %v803 = vld [vmem:[#allocation8 + $0xfe0] sm:$0xff]
    %v804 = vld [vmem:[#allocation8 + $0xfe8] sm:$0xff]
    %v805 = vld [vmem:[#allocation8 + $0xff0] sm:$0xff]
    %v806 = vld [vmem:[#allocation8 + $0xff8] sm:$0xff]
    %v807 = vld [vmem:[#allocation10] sm:$0xff]
    %v809 = vlaneseq
    %v810 = vshrl.u32 %v809, 7
    %v811 = vsub.s32 0, %v810
    %v812 = vrot.slane %v807, %v811
    %v813 = vlaneseq
    %v814 = vshrl.u32 %v813, 7
    %v815 = vsub.s32 1, %v814
    %v816 = vrot.slane %v807, %v815
    %v817 = vlaneseq
    %v818 = vshrl.u32 %v817, 7
    %v819 = vsub.s32 2, %v818
    %v820 = vrot.slane %v807, %v819
    %v821 = vlaneseq
    %v822 = vshrl.u32 %v821, 7
    %v823 = vsub.s32 3, %v822
    %v824 = vrot.slane %v807, %v823
    %v825 = vlaneseq
    %v826 = vshrl.u32 %v825, 7
    %v827 = vsub.s32 4, %v826
    %v828 = vrot.slane %v807, %v827
    %v829 = vlaneseq
    %v830 = vshrl.u32 %v829, 7
    %v831 = vsub.s32 5, %v830
    %v832 = vrot.slane %v807, %v831
    %v833 = vlaneseq
    %v834 = vshrl.u32 %v833, 7
    %v835 = vsub.s32 6, %v834
    %v836 = vrot.slane %v807, %v835
    %v837 = vlaneseq
    %v838 = vshrl.u32 %v837, 7
    %v839 = vsub.s32 7, %v838
    %v840 = vrot.slane %v807, %v839
    %849 = vmatprep.subr.mxu0 %v296
    %850 = vmatpush1.msra.mxu0 %v295
    %851 = vmatprep.subr.mxu0 %v304
    %852 = vmatpush1.msra.mxu0 %v303
    %853 = vmatprep.subr.mxu0 %v312
    %854 = vmatpush1.msra.mxu0 %v311
    %855 = vmatprep.subr.mxu0 %v320
    %856 = vmatpush1.msra.mxu0 %v319
    %857 = vmatprep.subr.mxu0 %v328
    %858 = vmatpush1.msra.mxu0 %v327
    %859 = vmatprep.subr.mxu0 %v336
    %860 = vmatpush1.msra.mxu0 %v335
    %861 = vmatprep.subr.mxu0 %v344
    %862 = vmatpush1.msra.mxu0 %v343
    %863 = vmatprep.subr.mxu0 %v352
    %864 = vmatpush1.msra.mxu0 %v351
    %865 = vmatprep.subr.mxu0 %v360
    %866 = vmatpush1.msra.mxu0 %v359
    %867 = vmatprep.subr.mxu0 %v368
    %868 = vmatpush1.msra.mxu0 %v367
    %869 = vmatprep.subr.mxu0 %v376
    %870 = vmatpush1.msra.mxu0 %v375
    %871 = vmatprep.subr.mxu0 %v384
    %872 = vmatpush1.msra.mxu0 %v383
    %873 = vmatprep.subr.mxu0 %v392
    %874 = vmatpush1.msra.mxu0 %v391
    %875 = vmatprep.subr.mxu0 %v400
    %876 = vmatpush1.msra.mxu0 %v399
    %877 = vmatprep.subr.mxu0 %v408
    %878 = vmatpush1.msra.mxu0 %v407
    %879 = vmatprep.subr.mxu0 %v416
    %880 = vmatpush1.msra.mxu0 %v415
    %881 = vmatprep.subr.mxu0 %v424
    %882 = vmatpush1.msra.mxu0 %v423
    %883 = vmatprep.subr.mxu0 %v432
    %884 = vmatpush1.msra.mxu0 %v431
    %885 = vmatprep.subr.mxu0 %v440
    %886 = vmatpush1.msra.mxu0 %v439
    %887 = vmatprep.subr.mxu0 %v448
    %888 = vmatpush1.msra.mxu0 %v447
    %889 = vmatprep.subr.mxu0 %v456
    %890 = vmatpush1.msra.mxu0 %v455
    %891 = vmatprep.subr.mxu0 %v464
    %892 = vmatpush1.msra.mxu0 %v463
    %893 = vmatprep.subr.mxu0 %v472
    %894 = vmatpush1.msra.mxu0 %v471
    %895 = vmatprep.subr.mxu0 %v480
    %896 = vmatpush1.msra.mxu0 %v479
    %897 = vmatprep.subr.mxu0 %v488
    %898 = vmatpush1.msra.mxu0 %v487
    %899 = vmatprep.subr.mxu0 %v496
    %900 = vmatpush1.msra.mxu0 %v495
    %901 = vmatprep.subr.mxu0 %v504
    %902 = vmatpush1.msra.mxu0 %v503
    %903 = vmatprep.subr.mxu0 %v512
    %904 = vmatpush1.msra.mxu0 %v511
    %905 = vmatprep.subr.mxu0 %v520
    %906 = vmatpush1.msra.mxu0 %v519
    %907 = vmatprep.subr.mxu0 %v528
    %908 = vmatpush1.msra.mxu0 %v527
    %909 = vmatprep.subr.mxu0 %v536
    %910 = vmatpush1.msra.mxu0 %v535
    %911 = vmatprep.subr.mxu0 %v544
    %912 = vmatpush1.msra.mxu0 %v543
    %913 = vmatprep.mubr.f32.mxu0 %v292
    %914 = vmatmul.mubr.f32.gmra.mrb[0].mxu0 %v291
    %v915 = vpop.f32.mrb[0].mxu0
    %v916 = vadd.f32 %v812, %v915
    %v917 = vpop.f32.mrb[0].mxu0
    %v918 = vadd.f32 %v816, %v917
    %919 = vdwg.mxu0
    %920 = vmatprep.subr.mxu0 %v552
    %921 = vmatpush1.msra.mxu0 %v551
    %922 = vmatprep.subr.mxu0 %v560
    %923 = vmatpush1.msra.mxu0 %v559
    %924 = vmatprep.subr.mxu0 %v568
    %925 = vmatpush1.msra.mxu0 %v567
    %926 = vmatprep.subr.mxu0 %v576
    %927 = vmatpush1.msra.mxu0 %v575
    %928 = vmatprep.subr.mxu0 %v584
    %929 = vmatpush1.msra.mxu0 %v583
    %930 = vmatprep.subr.mxu0 %v592
    %931 = vmatpush1.msra.mxu0 %v591
    %932 = vmatprep.subr.mxu0 %v600
    %933 = vmatpush1.msra.mxu0 %v599
    %934 = vmatprep.subr.mxu0 %v608
    %935 = vmatpush1.msra.mxu0 %v607
    %936 = vmatprep.subr.mxu0 %v616
    %937 = vmatpush1.msra.mxu0 %v615
    %938 = vmatprep.subr.mxu0 %v624
    %939 = vmatpush1.msra.mxu0 %v623
    %940 = vmatprep.subr.mxu0 %v632
    %941 = vmatpush1.msra.mxu0 %v631
    %942 = vmatprep.subr.mxu0 %v640
    %943 = vmatpush1.msra.mxu0 %v639
    %944 = vmatprep.subr.mxu0 %v648
    %945 = vmatpush1.msra.mxu0 %v647
    %946 = vmatprep.subr.mxu0 %v656
    %947 = vmatpush1.msra.mxu0 %v655
    %948 = vmatprep.subr.mxu0 %v664
    %949 = vmatpush1.msra.mxu0 %v663
    %950 = vmatprep.subr.mxu0 %v672
    %951 = vmatpush1.msra.mxu0 %v671
    %952 = vmatprep.subr.mxu0 %v680
    %953 = vmatpush1.msra.mxu0 %v679
    %954 = vmatprep.subr.mxu0 %v688
    %955 = vmatpush1.msra.mxu0 %v687
    %956 = vmatprep.subr.mxu0 %v696
    %957 = vmatpush1.msra.mxu0 %v695
    %958 = vmatprep.subr.mxu0 %v704
    %959 = vmatpush1.msra.mxu0 %v703
    %960 = vmatprep.subr.mxu0 %v712
    %961 = vmatpush1.msra.mxu0 %v711
    %962 = vmatprep.subr.mxu0 %v720
    %963 = vmatpush1.msra.mxu0 %v719
    %964 = vmatprep.subr.mxu0 %v728
    %965 = vmatpush1.msra.mxu0 %v727
    %966 = vmatprep.subr.mxu0 %v736
    %967 = vmatpush1.msra.mxu0 %v735
    %968 = vmatprep.subr.mxu0 %v744
    %969 = vmatpush1.msra.mxu0 %v743
    %970 = vmatprep.subr.mxu0 %v752
    %971 = vmatpush1.msra.mxu0 %v751
    %972 = vmatprep.subr.mxu0 %v760
    %973 = vmatpush1.msra.mxu0 %v759
    %974 = vmatprep.subr.mxu0 %v768
    %975 = vmatpush1.msra.mxu0 %v767
    %976 = vmatprep.subr.mxu0 %v776
    %977 = vmatpush1.msra.mxu0 %v775
    %978 = vmatprep.subr.mxu0 %v784
    %979 = vmatpush1.msra.mxu0 %v783
    %980 = vmatprep.subr.mxu0 %v792
    %981 = vmatpush1.msra.mxu0 %v791
    %982 = vmatprep.subr.mxu0 %v800
    %983 = vmatpush1.msra.mxu0 %v799
    %984 = vmatprep.mubr.f32.mxu0 %v294
    %985 = vmatmul.mubr.f32.gmra.mrb[0].mxu0 %v293
    %v986 = vpop.f32.mrb[0].mxu0
    %v987 = vadd.f32 %v916, %v986
    %v988 = vpop.f32.mrb[0].mxu0
    %v989 = vadd.f32 %v918, %v988
    %990 = vdwg.mxu0
    %991 = vmatprep.subr.mxu0 %v298
    %992 = vmatpush1.msra.mxu0 %v297
    %993 = vmatprep.subr.mxu0 %v306
    %994 = vmatpush1.msra.mxu0 %v305
    %995 = vmatprep.subr.mxu0 %v314
    %996 = vmatpush1.msra.mxu0 %v313
    %997 = vmatprep.subr.mxu0 %v322
    %998 = vmatpush1.msra.mxu0 %v321
    %999 = vmatprep.subr.mxu0 %v330
    %1000 = vmatpush1.msra.mxu0 %v329
    %1001 = vmatprep.subr.mxu0 %v338
    %1002 = vmatpush1.msra.mxu0 %v337
    %1003 = vmatprep.subr.mxu0 %v346
    %1004 = vmatpush1.msra.mxu0 %v345
    %1005 = vmatprep.subr.mxu0 %v354
    %1006 = vmatpush1.msra.mxu0 %v353
    %1007 = vmatprep.subr.mxu0 %v362
    %1008 = vmatpush1.msra.mxu0 %v361
    %1009 = vmatprep.subr.mxu0 %v370
    %1010 = vmatpush1.msra.mxu0 %v369
    %1011 = vmatprep.subr.mxu0 %v378
    %1012 = vmatpush1.msra.mxu0 %v377
    %1013 = vmatprep.subr.mxu0 %v386
    %1014 = vmatpush1.msra.mxu0 %v385
    %1015 = vmatprep.subr.mxu0 %v394
    %1016 = vmatpush1.msra.mxu0 %v393
    %1017 = vmatprep.subr.mxu0 %v402
    %1018 = vmatpush1.msra.mxu0 %v401
    %1019 = vmatprep.subr.mxu0 %v410
    %1020 = vmatpush1.msra.mxu0 %v409
    %1021 = vmatprep.subr.mxu0 %v418
    %1022 = vmatpush1.msra.mxu0 %v417
    %1023 = vmatprep.subr.mxu0 %v426
    %1024 = vmatpush1.msra.mxu0 %v425
    %1025 = vmatprep.subr.mxu0 %v434
    %1026 = vmatpush1.msra.mxu0 %v433
    %1027 = vmatprep.subr.mxu0 %v442
    %1028 = vmatpush1.msra.mxu0 %v441
    %1029 = vmatprep.subr.mxu0 %v450
    %1030 = vmatpush1.msra.mxu0 %v449
    %1031 = vmatprep.subr.mxu0 %v458
    %1032 = vmatpush1.msra.mxu0 %v457
    %1033 = vmatprep.subr.mxu0 %v466
    %1034 = vmatpush1.msra.mxu0 %v465
    %1035 = vmatprep.subr.mxu0 %v474
    %1036 = vmatpush1.msra.mxu0 %v473
    %1037 = vmatprep.subr.mxu0 %v482
    %1038 = vmatpush1.msra.mxu0 %v481
    %1039 = vmatprep.subr.mxu0 %v490
    %1040 = vmatpush1.msra.mxu0 %v489
    %1041 = vmatprep.subr.mxu0 %v498
    %1042 = vmatpush1.msra.mxu0 %v497
    %1043 = vmatprep.subr.mxu0 %v506
    %1044 = vmatpush1.msra.mxu0 %v505
    %1045 = vmatprep.subr.mxu0 %v514
    %1046 = vmatpush1.msra.mxu0 %v513
    %1047 = vmatprep.subr.mxu0 %v522
    %1048 = vmatpush1.msra.mxu0 %v521
    %1049 = vmatprep.subr.mxu0 %v530
    %1050 = vmatpush1.msra.mxu0 %v529
    %1051 = vmatprep.subr.mxu0 %v538
    %1052 = vmatpush1.msra.mxu0 %v537
    %1053 = vmatprep.subr.mxu0 %v546
    %1054 = vmatpush1.msra.mxu0 %v545
    %1055 = vmatprep.mubr.f32.mxu0 %v292
    %1056 = vmatmul.mubr.f32.gmra.mrb[0].mxu0 %v291
    %v1057 = vpop.f32.mrb[0].mxu0
    %v1058 = vadd.f32 %v820, %v1057
    %v1059 = vpop.f32.mrb[0].mxu0
    %v1060 = vadd.f32 %v824, %v1059
    %1061 = vdwg.mxu0
    %1062 = vmatprep.subr.mxu0 %v554
    %1063 = vmatpush1.msra.mxu0 %v553
    %1064 = vmatprep.subr.mxu0 %v562
    %1065 = vmatpush1.msra.mxu0 %v561
    %1066 = vmatprep.subr.mxu0 %v570
    %1067 = vmatpush1.msra.mxu0 %v569
    %1068 = vmatprep.subr.mxu0 %v578
    %1069 = vmatpush1.msra.mxu0 %v577
    %1070 = vmatprep.subr.mxu0 %v586
    %1071 = vmatpush1.msra.mxu0 %v585
    %1072 = vmatprep.subr.mxu0 %v594
    %1073 = vmatpush1.msra.mxu0 %v593
    %1074 = vmatprep.subr.mxu0 %v602
    %1075 = vmatpush1.msra.mxu0 %v601
    %1076 = vmatprep.subr.mxu0 %v610
    %1077 = vmatpush1.msra.mxu0 %v609
    %1078 = vmatprep.subr.mxu0 %v618
    %1079 = vmatpush1.msra.mxu0 %v617
    %1080 = vmatprep.subr.mxu0 %v626
    %1081 = vmatpush1.msra.mxu0 %v625
    %1082 = vmatprep.subr.mxu0 %v634
    %1083 = vmatpush1.msra.mxu0 %v633
    %1084 = vmatprep.subr.mxu0 %v642
    %1085 = vmatpush1.msra.mxu0 %v641
    %1086 = vmatprep.subr.mxu0 %v650
    %1087 = vmatpush1.msra.mxu0 %v649
    %1088 = vmatprep.subr.mxu0 %v658
    %1089 = vmatpush1.msra.mxu0 %v657
    %1090 = vmatprep.subr.mxu0 %v666
    %1091 = vmatpush1.msra.mxu0 %v665
    %1092 = vmatprep.subr.mxu0 %v674
    %1093 = vmatpush1.msra.mxu0 %v673
    %1094 = vmatprep.subr.mxu0 %v682
    %1095 = vmatpush1.msra.mxu0 %v681
    %1096 = vmatprep.subr.mxu0 %v690
    %1097 = vmatpush1.msra.mxu0 %v689
    %1098 = vmatprep.subr.mxu0 %v698
    %1099 = vmatpush1.msra.mxu0 %v697
    %1100 = vmatprep.subr.mxu0 %v706
    %1101 = vmatpush1.msra.mxu0 %v705
    %1102 = vmatprep.subr.mxu0 %v714
    %1103 = vmatpush1.msra.mxu0 %v713
    %1104 = vmatprep.subr.mxu0 %v722
    %1105 = vmatpush1.msra.mxu0 %v721
    %1106 = vmatprep.subr.mxu0 %v730
    %1107 = vmatpush1.msra.mxu0 %v729
    %1108 = vmatprep.subr.mxu0 %v738
    %1109 = vmatpush1.msra.mxu0 %v737
    %1110 = vmatprep.subr.mxu0 %v746
    %1111 = vmatpush1.msra.mxu0 %v745
    %1112 = vmatprep.subr.mxu0 %v754
    %1113 = vmatpush1.msra.mxu0 %v753
    %1114 = vmatprep.subr.mxu0 %v762
    %1115 = vmatpush1.msra.mxu0 %v761
    %1116 = vmatprep.subr.mxu0 %v770
    %1117 = vmatpush1.msra.mxu0 %v769
    %1118 = vmatprep.subr.mxu0 %v778
    %1119 = vmatpush1.msra.mxu0 %v777
    %1120 = vmatprep.subr.mxu0 %v786
    %1121 = vmatpush1.msra.mxu0 %v785
    %1122 = vmatprep.subr.mxu0 %v794
    %1123 = vmatpush1.msra.mxu0 %v793
    %1124 = vmatprep.subr.mxu0 %v802
    %1125 = vmatpush1.msra.mxu0 %v801
    %1126 = vmatprep.mubr.f32.mxu0 %v294
    %1127 = vmatmul.mubr.f32.gmra.mrb[0].mxu0 %v293
    %v1128 = vpop.f32.mrb[0].mxu0
    %v1129 = vadd.f32 %v1058, %v1128
    %v1130 = vpop.f32.mrb[0].mxu0
    %v1131 = vadd.f32 %v1060, %v1130
    %1132 = vdwg.mxu0
    %1133 = vmatprep.subr.mxu0 %v300
    %1134 = vmatpush1.msra.mxu0 %v299
    %1135 = vmatprep.subr.mxu0 %v308
    %1136 = vmatpush1.msra.mxu0 %v307
    %1137 = vmatprep.subr.mxu0 %v316
    %1138 = vmatpush1.msra.mxu0 %v315
    %1139 = vmatprep.subr.mxu0 %v324
    %1140 = vmatpush1.msra.mxu0 %v323
    %1141 = vmatprep.subr.mxu0 %v332
    %1142 = vmatpush1.msra.mxu0 %v331
    %1143 = vmatprep.subr.mxu0 %v340
    %1144 = vmatpush1.msra.mxu0 %v339
    %1145 = vmatprep.subr.mxu0 %v348
    %1146 = vmatpush1.msra.mxu0 %v347
    %1147 = vmatprep.subr.mxu0 %v356
    %1148 = vmatpush1.msra.mxu0 %v355
    %1149 = vmatprep.subr.mxu0 %v364
    %1150 = vmatpush1.msra.mxu0 %v363
    %1151 = vmatprep.subr.mxu0 %v372
    %1152 = vmatpush1.msra.mxu0 %v371
    %1153 = vmatprep.subr.mxu0 %v380
    %1154 = vmatpush1.msra.mxu0 %v379
    %1155 = vmatprep.subr.mxu0 %v388
    %1156 = vmatpush1.msra.mxu0 %v387
    %1157 = vmatprep.subr.mxu0 %v396
    %1158 = vmatpush1.msra.mxu0 %v395
    %1159 = vmatprep.subr.mxu0 %v404
    %1160 = vmatpush1.msra.mxu0 %v403
    %1161 = vmatprep.subr.mxu0 %v412
    %1162 = vmatpush1.msra.mxu0 %v411
    %1163 = vmatprep.subr.mxu0 %v420
    %1164 = vmatpush1.msra.mxu0 %v419
    %1165 = vmatprep.subr.mxu0 %v428
    %1166 = vmatpush1.msra.mxu0 %v427
    %1167 = vmatprep.subr.mxu0 %v436
    %1168 = vmatpush1.msra.mxu0 %v435
    %1169 = vmatprep.subr.mxu0 %v444
    %1170 = vmatpush1.msra.mxu0 %v443
    %1171 = vmatprep.subr.mxu0 %v452
    %1172 = vmatpush1.msra.mxu0 %v451
    %1173 = vmatprep.subr.mxu0 %v460
    %1174 = vmatpush1.msra.mxu0 %v459
    %1175 = vmatprep.subr.mxu0 %v468
    %1176 = vmatpush1.msra.mxu0 %v467
    %1177 = vmatprep.subr.mxu0 %v476
    %1178 = vmatpush1.msra.mxu0 %v475
    %1179 = vmatprep.subr.mxu0 %v484
    %1180 = vmatpush1.msra.mxu0 %v483
    %1181 = vmatprep.subr.mxu0 %v492
    %1182 = vmatpush1.msra.mxu0 %v491
    %1183 = vmatprep.subr.mxu0 %v500
    %1184 = vmatpush1.msra.mxu0 %v499
    %1185 = vmatprep.subr.mxu0 %v508
    %1186 = vmatpush1.msra.mxu0 %v507
    %1187 = vmatprep.subr.mxu0 %v516
    %1188 = vmatpush1.msra.mxu0 %v515
    %1189 = vmatprep.subr.mxu0 %v524
    %1190 = vmatpush1.msra.mxu0 %v523
    %1191 = vmatprep.subr.mxu0 %v532
    %1192 = vmatpush1.msra.mxu0 %v531
    %1193 = vmatprep.subr.mxu0 %v540
    %1194 = vmatpush1.msra.mxu0 %v539
    %1195 = vmatprep.subr.mxu0 %v548
    %1196 = vmatpush1.msra.mxu0 %v547
    %1197 = vmatprep.mubr.f32.mxu0 %v292
    %1198 = vmatmul.mubr.f32.gmra.mrb[0].mxu0 %v291
    %v1199 = vpop.f32.mrb[0].mxu0
    %v1200 = vadd.f32 %v828, %v1199
    %v1201 = vpop.f32.mrb[0].mxu0
    %v1202 = vadd.f32 %v832, %v1201
    %1203 = vdwg.mxu0
    %1204 = vmatprep.subr.mxu0 %v556
    %1205 = vmatpush1.msra.mxu0 %v555
    %1206 = vmatprep.subr.mxu0 %v564
    %1207 = vmatpush1.msra.mxu0 %v563
    %1208 = vmatprep.subr.mxu0 %v572
    %1209 = vmatpush1.msra.mxu0 %v571
    %1210 = vmatprep.subr.mxu0 %v580
    %1211 = vmatpush1.msra.mxu0 %v579
    %1212 = vmatprep.subr.mxu0 %v588
    %1213 = vmatpush1.msra.mxu0 %v587
    %1214 = vmatprep.subr.mxu0 %v596
    %1215 = vmatpush1.msra.mxu0 %v595
    %1216 = vmatprep.subr.mxu0 %v604
    %1217 = vmatpush1.msra.mxu0 %v603
    %1218 = vmatprep.subr.mxu0 %v612
    %1219 = vmatpush1.msra.mxu0 %v611
    %1220 = vmatprep.subr.mxu0 %v620
    %1221 = vmatpush1.msra.mxu0 %v619
    %1222 = vmatprep.subr.mxu0 %v628
    %1223 = vmatpush1.msra.mxu0 %v627
    %1224 = vmatprep.subr.mxu0 %v636
    %1225 = vmatpush1.msra.mxu0 %v635
    %1226 = vmatprep.subr.mxu0 %v644
    %1227 = vmatpush1.msra.mxu0 %v643
    %1228 = vmatprep.subr.mxu0 %v652
    %1229 = vmatpush1.msra.mxu0 %v651
    %1230 = vmatprep.subr.mxu0 %v660
    %1231 = vmatpush1.msra.mxu0 %v659
    %1232 = vmatprep.subr.mxu0 %v668
    %1233 = vmatpush1.msra.mxu0 %v667
    %1234 = vmatprep.subr.mxu0 %v676
    %1235 = vmatpush1.msra.mxu0 %v675
    %1236 = vmatprep.subr.mxu0 %v684
    %1237 = vmatpush1.msra.mxu0 %v683
    %1238 = vmatprep.subr.mxu0 %v692
    %1239 = vmatpush1.msra.mxu0 %v691
    %1240 = vmatprep.subr.mxu0 %v700
    %1241 = vmatpush1.msra.mxu0 %v699
    %1242 = vmatprep.subr.mxu0 %v708
    %1243 = vmatpush1.msra.mxu0 %v707
    %1244 = vmatprep.subr.mxu0 %v716
    %1245 = vmatpush1.msra.mxu0 %v715
    %1246 = vmatprep.subr.mxu0 %v724
    %1247 = vmatpush1.msra.mxu0 %v723
    %1248 = vmatprep.subr.mxu0 %v732
    %1249 = vmatpush1.msra.mxu0 %v731
    %1250 = vmatprep.subr.mxu0 %v740
    %1251 = vmatpush1.msra.mxu0 %v739
    %1252 = vmatprep.subr.mxu0 %v748
    %1253 = vmatpush1.msra.mxu0 %v747
    %1254 = vmatprep.subr.mxu0 %v756
    %1255 = vmatpush1.msra.mxu0 %v755
    %1256 = vmatprep.subr.mxu0 %v764
    %1257 = vmatpush1.msra.mxu0 %v763
    %1258 = vmatprep.subr.mxu0 %v772
    %1259 = vmatpush1.msra.mxu0 %v771
    %1260 = vmatprep.subr.mxu0 %v780
    %1261 = vmatpush1.msra.mxu0 %v779
    %1262 = vmatprep.subr.mxu0 %v788
    %1263 = vmatpush1.msra.mxu0 %v787
    %1264 = vmatprep.subr.mxu0 %v796
    %1265 = vmatpush1.msra.mxu0 %v795
    %1266 = vmatprep.subr.mxu0 %v804
    %1267 = vmatpush1.msra.mxu0 %v803
    %1268 = vmatprep.mubr.f32.mxu0 %v294
    %1269 = vmatmul.mubr.f32.gmra.mrb[0].mxu0 %v293
    %v1270 = vpop.f32.mrb[0].mxu0
    %v1271 = vadd.f32 %v1200, %v1270
    %v1272 = vpop.f32.mrb[0].mxu0
    %v1273 = vadd.f32 %v1202, %v1272
    %1274 = vdwg.mxu0
    %1275 = vmatprep.subr.mxu0 %v302
    %1276 = vmatpush1.msra.mxu0 %v301
    %1277 = vmatprep.subr.mxu0 %v310
    %1278 = vmatpush1.msra.mxu0 %v309
    %1279 = vmatprep.subr.mxu0 %v318
    %1280 = vmatpush1.msra.mxu0 %v317
    %1281 = vmatprep.subr.mxu0 %v326
    %1282 = vmatpush1.msra.mxu0 %v325
    %1283 = vmatprep.subr.mxu0 %v334
    %1284 = vmatpush1.msra.mxu0 %v333
    %1285 = vmatprep.subr.mxu0 %v342
    %1286 = vmatpush1.msra.mxu0 %v341
    %1287 = vmatprep.subr.mxu0 %v350
    %1288 = vmatpush1.msra.mxu0 %v349
    %1289 = vmatprep.subr.mxu0 %v358
    %1290 = vmatpush1.msra.mxu0 %v357
    %1291 = vmatprep.subr.mxu0 %v366
    %1292 = vmatpush1.msra.mxu0 %v365
    %1293 = vmatprep.subr.mxu0 %v374
    %1294 = vmatpush1.msra.mxu0 %v373
    %1295 = vmatprep.subr.mxu0 %v382
    %1296 = vmatpush1.msra.mxu0 %v381
    %1297 = vmatprep.subr.mxu0 %v390
    %1298 = vmatpush1.msra.mxu0 %v389
    %1299 = vmatprep.subr.mxu0 %v398
    %1300 = vmatpush1.msra.mxu0 %v397
    %1301 = vmatprep.subr.mxu0 %v406
    %1302 = vmatpush1.msra.mxu0 %v405
    %1303 = vmatprep.subr.mxu0 %v414
    %1304 = vmatpush1.msra.mxu0 %v413
    %1305 = vmatprep.subr.mxu0 %v422
    %1306 = vmatpush1.msra.mxu0 %v421
    %1307 = vmatprep.subr.mxu0 %v430
    %1308 = vmatpush1.msra.mxu0 %v429
    %1309 = vmatprep.subr.mxu0 %v438
    %1310 = vmatpush1.msra.mxu0 %v437
    %1311 = vmatprep.subr.mxu0 %v446
    %1312 = vmatpush1.msra.mxu0 %v445
    %1313 = vmatprep.subr.mxu0 %v454
    %1314 = vmatpush1.msra.mxu0 %v453
    %1315 = vmatprep.subr.mxu0 %v462
    %1316 = vmatpush1.msra.mxu0 %v461
    %1317 = vmatprep.subr.mxu0 %v470
    %1318 = vmatpush1.msra.mxu0 %v469
    %1319 = vmatprep.subr.mxu0 %v478
    %1320 = vmatpush1.msra.mxu0 %v477
    %1321 = vmatprep.subr.mxu0 %v486
    %1322 = vmatpush1.msra.mxu0 %v485
    %1323 = vmatprep.subr.mxu0 %v494
    %1324 = vmatpush1.msra.mxu0 %v493
    %1325 = vmatprep.subr.mxu0 %v502
    %1326 = vmatpush1.msra.mxu0 %v501
    %1327 = vmatprep.subr.mxu0 %v510
    %1328 = vmatpush1.msra.mxu0 %v509
    %1329 = vmatprep.subr.mxu0 %v518
    %1330 = vmatpush1.msra.mxu0 %v517
    %1331 = vmatprep.subr.mxu0 %v526
    %1332 = vmatpush1.msra.mxu0 %v525
    %1333 = vmatprep.subr.mxu0 %v534
    %1334 = vmatpush1.msra.mxu0 %v533
    %1335 = vmatprep.subr.mxu0 %v542
    %1336 = vmatpush1.msra.mxu0 %v541
    %1337 = vmatprep.subr.mxu0 %v550
    %1338 = vmatpush1.msra.mxu0 %v549
    %1339 = vmatprep.mubr.f32.mxu0 %v292
    %1340 = vmatmul.mubr.f32.gmra.mrb[0].mxu0 %v291
    %v1341 = vpop.f32.mrb[0].mxu0
    %v1342 = vadd.f32 %v836, %v1341
    %v1343 = vpop.f32.mrb[0].mxu0
    %v1344 = vadd.f32 %v840, %v1343
    %1345 = vdwg.mxu0
    %1346 = vmatprep.subr.mxu0 %v558
    %1347 = vmatpush1.msra.mxu0 %v557
    %1348 = vmatprep.subr.mxu0 %v566
    %1349 = vmatpush1.msra.mxu0 %v565
    %1350 = vmatprep.subr.mxu0 %v574
    %1351 = vmatpush1.msra.mxu0 %v573
    %1352 = vmatprep.subr.mxu0 %v582
    %1353 = vmatpush1.msra.mxu0 %v581
    %1354 = vmatprep.subr.mxu0 %v590
    %1355 = vmatpush1.msra.mxu0 %v589
    %1356 = vmatprep.subr.mxu0 %v598
    %1357 = vmatpush1.msra.mxu0 %v597
    %1358 = vmatprep.subr.mxu0 %v606
    %1359 = vmatpush1.msra.mxu0 %v605
    %1360 = vmatprep.subr.mxu0 %v614
    %1361 = vmatpush1.msra.mxu0 %v613
    %1362 = vmatprep.subr.mxu0 %v622
    %1363 = vmatpush1.msra.mxu0 %v621
    %1364 = vmatprep.subr.mxu0 %v630
    %1365 = vmatpush1.msra.mxu0 %v629
    %1366 = vmatprep.subr.mxu0 %v638
    %1367 = vmatpush1.msra.mxu0 %v637
    %1368 = vmatprep.subr.mxu0 %v646
    %1369 = vmatpush1.msra.mxu0 %v645
    %1370 = vmatprep.subr.mxu0 %v654
    %1371 = vmatpush1.msra.mxu0 %v653
    %1372 = vmatprep.subr.mxu0 %v662
    %1373 = vmatpush1.msra.mxu0 %v661
    %1374 = vmatprep.subr.mxu0 %v670
    %1375 = vmatpush1.msra.mxu0 %v669
    %1376 = vmatprep.subr.mxu0 %v678
    %1377 = vmatpush1.msra.mxu0 %v677
    %1378 = vmatprep.subr.mxu0 %v686
    %1379 = vmatpush1.msra.mxu0 %v685
    %1380 = vmatprep.subr.mxu0 %v694
    %1381 = vmatpush1.msra.mxu0 %v693
    %1382 = vmatprep.subr.mxu0 %v702
    %1383 = vmatpush1.msra.mxu0 %v701
    %1384 = vmatprep.subr.mxu0 %v710
    %1385 = vmatpush1.msra.mxu0 %v709
    %1386 = vmatprep.subr.mxu0 %v718
    %1387 = vmatpush1.msra.mxu0 %v717
    %1388 = vmatprep.subr.mxu0 %v726
    %1389 = vmatpush1.msra.mxu0 %v725
    %1390 = vmatprep.subr.mxu0 %v734
    %1391 = vmatpush1.msra.mxu0 %v733
    %1392 = vmatprep.subr.mxu0 %v742
    %1393 = vmatpush1.msra.mxu0 %v741
    %1394 = vmatprep.subr.mxu0 %v750
    %1395 = vmatpush1.msra.mxu0 %v749
    %1396 = vmatprep.subr.mxu0 %v758
    %1397 = vmatpush1.msra.mxu0 %v757
    %1398 = vmatprep.subr.mxu0 %v766
    %1399 = vmatpush1.msra.mxu0 %v765
    %1400 = vmatprep.subr.mxu0 %v774
    %1401 = vmatpush1.msra.mxu0 %v773
    %1402 = vmatprep.subr.mxu0 %v782
    %1403 = vmatpush1.msra.mxu0 %v781
    %1404 = vmatprep.subr.mxu0 %v790
    %1405 = vmatpush1.msra.mxu0 %v789
    %1406 = vmatprep.subr.mxu0 %v798
    %1407 = vmatpush1.msra.mxu0 %v797
    %1408 = vmatprep.subr.mxu0 %v806
    %1409 = vmatpush1.msra.mxu0 %v805
    %1410 = vmatprep.mubr.f32.mxu0 %v294
    %1411 = vmatmul.mubr.f32.gmra.mrb[0].mxu0 %v293
    %v1412 = vpop.f32.mrb[0].mxu0
    %v1413 = vadd.f32 %v1342, %v1412
    %v1414 = vpop.f32.mrb[0].mxu0
    %v1415 = vadd.f32 %v1344, %v1414
    %1416 = vdwg.mxu0
    %v1417 = vmax.f32 %v987, 0.0
    %v1418 = vmax.f32 %v989, 0.0
    %v1419 = vmax.f32 %v1129, 0.0
    %v1420 = vmax.f32 %v1131, 0.0
    %v1421 = vmax.f32 %v1271, 0.0
    %v1422 = vmax.f32 %v1273, 0.0
    %v1423 = vmax.f32 %v1413, 0.0
    %v1424 = vmax.f32 %v1415, 0.0
    %v1425 = vld [vmem:[#allocation11] sm:$0xff]
    %v1426 = vld [vmem:[#allocation11 + $0x8] sm:$0xff]
    %v1427 = vld [vmem:[#allocation11 + $0x10] sm:$0xff]
    %v1428 = vld [vmem:[#allocation11 + $0x18] sm:$0xff]
    %v1429 = vld [vmem:[#allocation11 + $0x20] sm:$0xff]
    %v1430 = vld [vmem:[#allocation11 + $0x28] sm:$0xff]
    %v1431 = vld [vmem:[#allocation11 + $0x30] sm:$0xff]
    %v1432 = vld [vmem:[#allocation11 + $0x38] sm:$0xff]
    %v1433 = vld [vmem:[#allocation11 + $0x40] sm:$0xff]
    %v1434 = vld [vmem:[#allocation11 + $0x48] sm:$0xff]
    %v1435 = vld [vmem:[#allocation11 + $0x50] sm:$0xff]
    %v1436 = vld [vmem:[#allocation11 + $0x58] sm:$0xff]
    %v1437 = vld [vmem:[#allocation11 + $0x60] sm:$0xff]
    %v1438 = vld [vmem:[#allocation11 + $0x68] sm:$0xff]
    %v1439 = vld [vmem:[#allocation11 + $0x70] sm:$0xff]
    %v1440 = vld [vmem:[#allocation11 + $0x78] sm:$0xff]
    %v1441 = vld [vmem:[#allocation11 + $0x80] sm:$0xff]
    %v1442 = vld [vmem:[#allocation11 + $0x88] sm:$0xff]
    %v1443 = vld [vmem:[#allocation11 + $0x90] sm:$0xff]
    %v1444 = vld [vmem:[#allocation11 + $0x98] sm:$0xff]
    %v1445 = vld [vmem:[#allocation11 + $0xa0] sm:$0xff]
    %v1446 = vld [vmem:[#allocation11 + $0xa8] sm:$0xff]
    %v1447 = vld [vmem:[#allocation11 + $0xb0] sm:$0xff]
    %v1448 = vld [vmem:[#allocation11 + $0xb8] sm:$0xff]
    %v1449 = vld [vmem:[#allocation11 + $0xc0] sm:$0xff]
    %v1450 = vld [vmem:[#allocation11 + $0xc8] sm:$0xff]
    %v1451 = vld [vmem:[#allocation11 + $0xd0] sm:$0xff]
    %v1452 = vld [vmem:[#allocation11 + $0xd8] sm:$0xff]
    %v1453 = vld [vmem:[#allocation11 + $0xe0] sm:$0xff]
    %v1454 = vld [vmem:[#allocation11 + $0xe8] sm:$0xff]
    %v1455 = vld [vmem:[#allocation11 + $0xf0] sm:$0xff]
    %v1456 = vld [vmem:[#allocation11 + $0xf8] sm:$0xff]
    %v1457 = vld [vmem:[#allocation11 + $0x100] sm:$0xff]
    %v1458 = vld [vmem:[#allocation11 + $0x108] sm:$0xff]
    %v1459 = vld [vmem:[#allocation11 + $0x110] sm:$0xff]
    %v1460 = vld [vmem:[#allocation11 + $0x118] sm:$0xff]
    %v1461 = vld [vmem:[#allocation11 + $0x120] sm:$0xff]
    %v1462 = vld [vmem:[#allocation11 + $0x128] sm:$0xff]
    %v1463 = vld [vmem:[#allocation11 + $0x130] sm:$0xff]
    %v1464 = vld [vmem:[#allocation11 + $0x138] sm:$0xff]
    %v1465 = vld [vmem:[#allocation11 + $0x140] sm:$0xff]
    %v1466 = vld [vmem:[#allocation11 + $0x148] sm:$0xff]
    %v1467 = vld [vmem:[#allocation11 + $0x150] sm:$0xff]
    %v1468 = vld [vmem:[#allocation11 + $0x158] sm:$0xff]
    %v1469 = vld [vmem:[#allocation11 + $0x160] sm:$0xff]
    %v1470 = vld [vmem:[#allocation11 + $0x168] sm:$0xff]
    %v1471 = vld [vmem:[#allocation11 + $0x170] sm:$0xff]
    %v1472 = vld [vmem:[#allocation11 + $0x178] sm:$0xff]
    %v1473 = vld [vmem:[#allocation11 + $0x180] sm:$0xff]
    %v1474 = vld [vmem:[#allocation11 + $0x188] sm:$0xff]
    %v1475 = vld [vmem:[#allocation11 + $0x190] sm:$0xff]
    %v1476 = vld [vmem:[#allocation11 + $0x198] sm:$0xff]
    %v1477 = vld [vmem:[#allocation11 + $0x1a0] sm:$0xff]
    %v1478 = vld [vmem:[#allocation11 + $0x1a8] sm:$0xff]
    %v1479 = vld [vmem:[#allocation11 + $0x1b0] sm:$0xff]
    %v1480 = vld [vmem:[#allocation11 + $0x1b8] sm:$0xff]
    %v1481 = vld [vmem:[#allocation11 + $0x1c0] sm:$0xff]
    %v1482 = vld [vmem:[#allocation11 + $0x1c8] sm:$0xff]
    %v1483 = vld [vmem:[#allocation11 + $0x1d0] sm:$0xff]
    %v1484 = vld [vmem:[#allocation11 + $0x1d8] sm:$0xff]
    %v1485 = vld [vmem:[#allocation11 + $0x1e0] sm:$0xff]
    %v1486 = vld [vmem:[#allocation11 + $0x1e8] sm:$0xff]
    %v1487 = vld [vmem:[#allocation11 + $0x1f0] sm:$0xff]
    %v1488 = vld [vmem:[#allocation11 + $0x1f8] sm:$0xff]
    %v1489 = vld [vmem:[#allocation11 + $0x200] sm:$0xff]
    %v1490 = vld [vmem:[#allocation11 + $0x208] sm:$0xff]
    %v1491 = vld [vmem:[#allocation11 + $0x210] sm:$0xff]
    %v1492 = vld [vmem:[#allocation11 + $0x218] sm:$0xff]
    %v1493 = vld [vmem:[#allocation11 + $0x220] sm:$0xff]
    %v1494 = vld [vmem:[#allocation11 + $0x228] sm:$0xff]
    %v1495 = vld [vmem:[#allocation11 + $0x230] sm:$0xff]
    %v1496 = vld [vmem:[#allocation11 + $0x238] sm:$0xff]
    %v1497 = vld [vmem:[#allocation11 + $0x240] sm:$0xff]
    %v1498 = vld [vmem:[#allocation11 + $0x248] sm:$0xff]
    %v1499 = vld [vmem:[#allocation11 + $0x250] sm:$0xff]
    %v1500 = vld [vmem:[#allocation11 + $0x258] sm:$0xff]
    %v1501 = vld [vmem:[#allocation11 + $0x260] sm:$0xff]
    %v1502 = vld [vmem:[#allocation11 + $0x268] sm:$0xff]
    %v1503 = vld [vmem:[#allocation11 + $0x270] sm:$0xff]
    %v1504 = vld [vmem:[#allocation11 + $0x278] sm:$0xff]
    %v1505 = vld [vmem:[#allocation11 + $0x280] sm:$0xff]
    %v1506 = vld [vmem:[#allocation11 + $0x288] sm:$0xff]
    %v1507 = vld [vmem:[#allocation11 + $0x290] sm:$0xff]
    %v1508 = vld [vmem:[#allocation11 + $0x298] sm:$0xff]
    %v1509 = vld [vmem:[#allocation11 + $0x2a0] sm:$0xff]
    %v1510 = vld [vmem:[#allocation11 + $0x2a8] sm:$0xff]
    %v1511 = vld [vmem:[#allocation11 + $0x2b0] sm:$0xff]
    %v1512 = vld [vmem:[#allocation11 + $0x2b8] sm:$0xff]
    %v1513 = vld [vmem:[#allocation11 + $0x2c0] sm:$0xff]
    %v1514 = vld [vmem:[#allocation11 + $0x2c8] sm:$0xff]
    %v1515 = vld [vmem:[#allocation11 + $0x2d0] sm:$0xff]
    %v1516 = vld [vmem:[#allocation11 + $0x2d8] sm:$0xff]
    %v1517 = vld [vmem:[#allocation11 + $0x2e0] sm:$0xff]
    %v1518 = vld [vmem:[#allocation11 + $0x2e8] sm:$0xff]
    %v1519 = vld [vmem:[#allocation11 + $0x2f0] sm:$0xff]
    %v1520 = vld [vmem:[#allocation11 + $0x2f8] sm:$0xff]
    %v1521 = vld [vmem:[#allocation11 + $0x300] sm:$0xff]
    %v1522 = vld [vmem:[#allocation11 + $0x308] sm:$0xff]
    %v1523 = vld [vmem:[#allocation11 + $0x310] sm:$0xff]
    %v1524 = vld [vmem:[#allocation11 + $0x318] sm:$0xff]
    %v1525 = vld [vmem:[#allocation11 + $0x320] sm:$0xff]
    %v1526 = vld [vmem:[#allocation11 + $0x328] sm:$0xff]
    %v1527 = vld [vmem:[#allocation11 + $0x330] sm:$0xff]
    %v1528 = vld [vmem:[#allocation11 + $0x338] sm:$0xff]
    %v1529 = vld [vmem:[#allocation11 + $0x340] sm:$0xff]
    %v1530 = vld [vmem:[#allocation11 + $0x348] sm:$0xff]
    %v1531 = vld [vmem:[#allocation11 + $0x350] sm:$0xff]
    %v1532 = vld [vmem:[#allocation11 + $0x358] sm:$0xff]
    %v1533 = vld [vmem:[#allocation11 + $0x360] sm:$0xff]
    %v1534 = vld [vmem:[#allocation11 + $0x368] sm:$0xff]
    %v1535 = vld [vmem:[#allocation11 + $0x370] sm:$0xff]
    %v1536 = vld [vmem:[#allocation11 + $0x378] sm:$0xff]
    %v1537 = vld [vmem:[#allocation11 + $0x380] sm:$0xff]
    %v1538 = vld [vmem:[#allocation11 + $0x388] sm:$0xff]
    %v1539 = vld [vmem:[#allocation11 + $0x390] sm:$0xff]
    %v1540 = vld [vmem:[#allocation11 + $0x398] sm:$0xff]
    %v1541 = vld [vmem:[#allocation11 + $0x3a0] sm:$0xff]
    %v1542 = vld [vmem:[#allocation11 + $0x3a8] sm:$0xff]
    %v1543 = vld [vmem:[#allocation11 + $0x3b0] sm:$0xff]
    %v1544 = vld [vmem:[#allocation11 + $0x3b8] sm:$0xff]
    %v1545 = vld [vmem:[#allocation11 + $0x3c0] sm:$0xff]
    %v1546 = vld [vmem:[#allocation11 + $0x3c8] sm:$0xff]
    %v1547 = vld [vmem:[#allocation11 + $0x3d0] sm:$0xff]
    %v1548 = vld [vmem:[#allocation11 + $0x3d8] sm:$0xff]
    %v1549 = vld [vmem:[#allocation11 + $0x3e0] sm:$0xff]
    %v1550 = vld [vmem:[#allocation11 + $0x3e8] sm:$0xff]
    %v1551 = vld [vmem:[#allocation11 + $0x3f0] sm:$0xff]
    %v1552 = vld [vmem:[#allocation11 + $0x3f8] sm:$0xff]
    %v1553 = vld [vmem:[#allocation13] sm:$0x1]
    %v1555 = vlaneseq
    %v1556 = vshrl.u32 %v1555, 7
    %v1557 = vsub.s32 0, %v1556
    %v1558 = vrot.slane %v1553, %v1557
    %1560 = vmatprep.subr.mxu0 0.0
    %1561 = vmatpush1.msra.mxu0 %v1425
    %1562 = vmatprep.subr.mxu0 0.0
    %1563 = vmatpush1.msra.mxu0 %v1426
    %1564 = vmatprep.subr.mxu0 0.0
    %1565 = vmatpush1.msra.mxu0 %v1427
    %1566 = vmatprep.subr.mxu0 0.0
    %1567 = vmatpush1.msra.mxu0 %v1428
    %1568 = vmatprep.subr.mxu0 0.0
    %1569 = vmatpush1.msra.mxu0 %v1429
    %1570 = vmatprep.subr.mxu0 0.0
    %1571 = vmatpush1.msra.mxu0 %v1430
    %1572 = vmatprep.subr.mxu0 0.0
    %1573 = vmatpush1.msra.mxu0 %v1431
    %1574 = vmatprep.subr.mxu0 0.0
    %1575 = vmatpush1.msra.mxu0 %v1432
    %1576 = vmatprep.subr.mxu0 0.0
    %1577 = vmatpush1.msra.mxu0 %v1433
    %1578 = vmatprep.subr.mxu0 0.0
    %1579 = vmatpush1.msra.mxu0 %v1434
    %1580 = vmatprep.subr.mxu0 0.0
    %1581 = vmatpush1.msra.mxu0 %v1435
    %1582 = vmatprep.subr.mxu0 0.0
    %1583 = vmatpush1.msra.mxu0 %v1436
    %1584 = vmatprep.subr.mxu0 0.0
    %1585 = vmatpush1.msra.mxu0 %v1437
    %1586 = vmatprep.subr.mxu0 0.0
    %1587 = vmatpush1.msra.mxu0 %v1438
    %1588 = vmatprep.subr.mxu0 0.0
    %1589 = vmatpush1.msra.mxu0 %v1439
    %1590 = vmatprep.subr.mxu0 0.0
    %1591 = vmatpush1.msra.mxu0 %v1440
    %1592 = vmatprep.subr.mxu0 0.0
    %1593 = vmatpush1.msra.mxu0 %v1441
    %1594 = vmatprep.subr.mxu0 0.0
    %1595 = vmatpush1.msra.mxu0 %v1442
    %1596 = vmatprep.subr.mxu0 0.0
    %1597 = vmatpush1.msra.mxu0 %v1443
    %1598 = vmatprep.subr.mxu0 0.0
    %1599 = vmatpush1.msra.mxu0 %v1444
    %1600 = vmatprep.subr.mxu0 0.0
    %1601 = vmatpush1.msra.mxu0 %v1445
    %1602 = vmatprep.subr.mxu0 0.0
    %1603 = vmatpush1.msra.mxu0 %v1446
    %1604 = vmatprep.subr.mxu0 0.0
    %1605 = vmatpush1.msra.mxu0 %v1447
    %1606 = vmatprep.subr.mxu0 0.0
    %1607 = vmatpush1.msra.mxu0 %v1448
    %1608 = vmatprep.subr.mxu0 0.0
    %1609 = vmatpush1.msra.mxu0 %v1449
    %1610 = vmatprep.subr.mxu0 0.0
    %1611 = vmatpush1.msra.mxu0 %v1450
    %1612 = vmatprep.subr.mxu0 0.0
    %1613 = vmatpush1.msra.mxu0 %v1451
    %1614 = vmatprep.subr.mxu0 0.0
    %1615 = vmatpush1.msra.mxu0 %v1452
    %1616 = vmatprep.subr.mxu0 0.0
    %1617 = vmatpush1.msra.mxu0 %v1453
    %1618 = vmatprep.subr.mxu0 0.0
    %1619 = vmatpush1.msra.mxu0 %v1454
    %1620 = vmatprep.subr.mxu0 0.0
    %1621 = vmatpush1.msra.mxu0 %v1455
    %1622 = vmatprep.subr.mxu0 0.0
    %1623 = vmatpush1.msra.mxu0 %v1456
    %1624 = vmatprep.mubr.f32.mxu0 %v1418
    %1625 = vmatmul.mubr.f32.gmra.mrb[0].mxu0 %v1417
    %v1626 = vpop.f32.mrb[0].mxu0
    %v1627 = vadd.f32 %v1558, %v1626
    %v1628 = vpop.f32.mrb[0].mxu0
    %1629 = vdwg.mxu0
    %1630 = vmatprep.subr.mxu0 0.0
    %1631 = vmatpush1.msra.mxu0 %v1457
    %1632 = vmatprep.subr.mxu0 0.0
    %1633 = vmatpush1.msra.mxu0 %v1458
    %1634 = vmatprep.subr.mxu0 0.0
    %1635 = vmatpush1.msra.mxu0 %v1459
    %1636 = vmatprep.subr.mxu0 0.0
    %1637 = vmatpush1.msra.mxu0 %v1460
    %1638 = vmatprep.subr.mxu0 0.0
    %1639 = vmatpush1.msra.mxu0 %v1461
    %1640 = vmatprep.subr.mxu0 0.0
    %1641 = vmatpush1.msra.mxu0 %v1462
    %1642 = vmatprep.subr.mxu0 0.0
    %1643 = vmatpush1.msra.mxu0 %v1463
    %1644 = vmatprep.subr.mxu0 0.0
    %1645 = vmatpush1.msra.mxu0 %v1464
    %1646 = vmatprep.subr.mxu0 0.0
    %1647 = vmatpush1.msra.mxu0 %v1465
    %1648 = vmatprep.subr.mxu0 0.0
    %1649 = vmatpush1.msra.mxu0 %v1466
    %1650 = vmatprep.subr.mxu0 0.0
    %1651 = vmatpush1.msra.mxu0 %v1467
    %1652 = vmatprep.subr.mxu0 0.0
    %1653 = vmatpush1.msra.mxu0 %v1468
    %1654 = vmatprep.subr.mxu0 0.0
    %1655 = vmatpush1.msra.mxu0 %v1469
    %1656 = vmatprep.subr.mxu0 0.0
    %1657 = vmatpush1.msra.mxu0 %v1470
    %1658 = vmatprep.subr.mxu0 0.0
    %1659 = vmatpush1.msra.mxu0 %v1471
    %1660 = vmatprep.subr.mxu0 0.0
    %1661 = vmatpush1.msra.mxu0 %v1472
    %1662 = vmatprep.subr.mxu0 0.0
    %1663 = vmatpush1.msra.mxu0 %v1473
    %1664 = vmatprep.subr.mxu0 0.0
    %1665 = vmatpush1.msra.mxu0 %v1474
    %1666 = vmatprep.subr.mxu0 0.0
    %1667 = vmatpush1.msra.mxu0 %v1475
    %1668 = vmatprep.subr.mxu0 0.0
    %1669 = vmatpush1.msra.mxu0 %v1476
    %1670 = vmatprep.subr.mxu0 0.0
    %1671 = vmatpush1.msra.mxu0 %v1477
    %1672 = vmatprep.subr.mxu0 0.0
    %1673 = vmatpush1.msra.mxu0 %v1478
    %1674 = vmatprep.subr.mxu0 0.0
    %1675 = vmatpush1.msra.mxu0 %v1479
    %1676 = vmatprep.subr.mxu0 0.0
    %1677 = vmatpush1.msra.mxu0 %v1480
    %1678 = vmatprep.subr.mxu0 0.0
    %1679 = vmatpush1.msra.mxu0 %v1481
    %1680 = vmatprep.subr.mxu0 0.0
    %1681 = vmatpush1.msra.mxu0 %v1482
    %1682 = vmatprep.subr.mxu0 0.0
    %1683 = vmatpush1.msra.mxu0 %v1483
    %1684 = vmatprep.subr.mxu0 0.0
    %1685 = vmatpush1.msra.mxu0 %v1484
    %1686 = vmatprep.subr.mxu0 0.0
    %1687 = vmatpush1.msra.mxu0 %v1485
    %1688 = vmatprep.subr.mxu0 0.0
    %1689 = vmatpush1.msra.mxu0 %v1486
    %1690 = vmatprep.subr.mxu0 0.0
    %1691 = vmatpush1.msra.mxu0 %v1487
    %1692 = vmatprep.subr.mxu0 0.0
    %1693 = vmatpush1.msra.mxu0 %v1488
    %1694 = vmatprep.mubr.f32.mxu0 %v1420
    %1695 = vmatmul.mubr.f32.gmra.mrb[0].mxu0 %v1419
    %v1696 = vpop.f32.mrb[0].mxu0
    %v1697 = vadd.f32 %v1627, %v1696
    %v1698 = vpop.f32.mrb[0].mxu0
    %1699 = vdwg.mxu0
    %1700 = vmatprep.subr.mxu0 0.0
    %1701 = vmatpush1.msra.mxu0 %v1489
    %1702 = vmatprep.subr.mxu0 0.0
    %1703 = vmatpush1.msra.mxu0 %v1490
    %1704 = vmatprep.subr.mxu0 0.0
    %1705 = vmatpush1.msra.mxu0 %v1491
    %1706 = vmatprep.subr.mxu0 0.0
    %1707 = vmatpush1.msra.mxu0 %v1492
    %1708 = vmatprep.subr.mxu0 0.0
    %1709 = vmatpush1.msra.mxu0 %v1493
    %1710 = vmatprep.subr.mxu0 0.0
    %1711 = vmatpush1.msra.mxu0 %v1494
    %1712 = vmatprep.subr.mxu0 0.0
    %1713 = vmatpush1.msra.mxu0 %v1495
    %1714 = vmatprep.subr.mxu0 0.0
    %1715 = vmatpush1.msra.mxu0 %v1496
    %1716 = vmatprep.subr.mxu0 0.0
    %1717 = vmatpush1.msra.mxu0 %v1497
    %1718 = vmatprep.subr.mxu0 0.0
    %1719 = vmatpush1.msra.mxu0 %v1498
    %1720 = vmatprep.subr.mxu0 0.0
    %1721 = vmatpush1.msra.mxu0 %v1499
    %1722 = vmatprep.subr.mxu0 0.0
    %1723 = vmatpush1.msra.mxu0 %v1500
    %1724 = vmatprep.subr.mxu0 0.0
    %1725 = vmatpush1.msra.mxu0 %v1501
    %1726 = vmatprep.subr.mxu0 0.0
    %1727 = vmatpush1.msra.mxu0 %v1502
    %1728 = vmatprep.subr.mxu0 0.0
    %1729 = vmatpush1.msra.mxu0 %v1503
    %1730 = vmatprep.subr.mxu0 0.0
    %1731 = vmatpush1.msra.mxu0 %v1504
    %1732 = vmatprep.subr.mxu0 0.0
    %1733 = vmatpush1.msra.mxu0 %v1505
    %1734 = vmatprep.subr.mxu0 0.0
    %1735 = vmatpush1.msra.mxu0 %v1506
    %1736 = vmatprep.subr.mxu0 0.0
    %1737 = vmatpush1.msra.mxu0 %v1507
    %1738 = vmatprep.subr.mxu0 0.0
    %1739 = vmatpush1.msra.mxu0 %v1508
    %1740 = vmatprep.subr.mxu0 0.0
    %1741 = vmatpush1.msra.mxu0 %v1509
    %1742 = vmatprep.subr.mxu0 0.0
    %1743 = vmatpush1.msra.mxu0 %v1510
    %1744 = vmatprep.subr.mxu0 0.0
    %1745 = vmatpush1.msra.mxu0 %v1511
    %1746 = vmatprep.subr.mxu0 0.0
    %1747 = vmatpush1.msra.mxu0 %v1512
    %1748 = vmatprep.subr.mxu0 0.0
    %1749 = vmatpush1.msra.mxu0 %v1513
    %1750 = vmatprep.subr.mxu0 0.0
    %1751 = vmatpush1.msra.mxu0 %v1514
    %1752 = vmatprep.subr.mxu0 0.0
    %1753 = vmatpush1.msra.mxu0 %v1515
    %1754 = vmatprep.subr.mxu0 0.0
    %1755 = vmatpush1.msra.mxu0 %v1516
    %1756 = vmatprep.subr.mxu0 0.0
    %1757 = vmatpush1.msra.mxu0 %v1517
    %1758 = vmatprep.subr.mxu0 0.0
    %1759 = vmatpush1.msra.mxu0 %v1518
    %1760 = vmatprep.subr.mxu0 0.0
    %1761 = vmatpush1.msra.mxu0 %v1519
    %1762 = vmatprep.subr.mxu0 0.0
    %1763 = vmatpush1.msra.mxu0 %v1520
    %1764 = vmatprep.mubr.f32.mxu0 %v1422
    %1765 = vmatmul.mubr.f32.gmra.mrb[0].mxu0 %v1421
    %v1766 = vpop.f32.mrb[0].mxu0
    %v1767 = vadd.f32 %v1697, %v1766
    %v1768 = vpop.f32.mrb[0].mxu0
    %1769 = vdwg.mxu0
    %1770 = vmatprep.subr.mxu0 0.0
    %1771 = vmatpush1.msra.mxu0 %v1521
    %1772 = vmatprep.subr.mxu0 0.0
    %1773 = vmatpush1.msra.mxu0 %v1522
    %1774 = vmatprep.subr.mxu0 0.0
    %1775 = vmatpush1.msra.mxu0 %v1523
    %1776 = vmatprep.subr.mxu0 0.0
    %1777 = vmatpush1.msra.mxu0 %v1524
    %1778 = vmatprep.subr.mxu0 0.0
    %1779 = vmatpush1.msra.mxu0 %v1525
    %1780 = vmatprep.subr.mxu0 0.0
    %1781 = vmatpush1.msra.mxu0 %v1526
    %1782 = vmatprep.subr.mxu0 0.0
    %1783 = vmatpush1.msra.mxu0 %v1527
    %1784 = vmatprep.subr.mxu0 0.0
    %1785 = vmatpush1.msra.mxu0 %v1528
    %1786 = vmatprep.subr.mxu0 0.0
    %1787 = vmatpush1.msra.mxu0 %v1529
    %1788 = vmatprep.subr.mxu0 0.0
    %1789 = vmatpush1.msra.mxu0 %v1530
    %1790 = vmatprep.subr.mxu0 0.0
    %1791 = vmatpush1.msra.mxu0 %v1531
    %1792 = vmatprep.subr.mxu0 0.0
    %1793 = vmatpush1.msra.mxu0 %v1532
    %1794 = vmatprep.subr.mxu0 0.0
    %1795 = vmatpush1.msra.mxu0 %v1533
    %1796 = vmatprep.subr.mxu0 0.0
    %1797 = vmatpush1.msra.mxu0 %v1534
    %1798 = vmatprep.subr.mxu0 0.0
    %1799 = vmatpush1.msra.mxu0 %v1535
    %1800 = vmatprep.subr.mxu0 0.0
    %1801 = vmatpush1.msra.mxu0 %v1536
    %1802 = vmatprep.subr.mxu0 0.0
    %1803 = vmatpush1.msra.mxu0 %v1537
    %1804 = vmatprep.subr.mxu0 0.0
    %1805 = vmatpush1.msra.mxu0 %v1538
    %1806 = vmatprep.subr.mxu0 0.0
    %1807 = vmatpush1.msra.mxu0 %v1539
    %1808 = vmatprep.subr.mxu0 0.0
    %1809 = vmatpush1.msra.mxu0 %v1540
    %1810 = vmatprep.subr.mxu0 0.0
    %1811 = vmatpush1.msra.mxu0 %v1541
    %1812 = vmatprep.subr.mxu0 0.0
    %1813 = vmatpush1.msra.mxu0 %v1542
    %1814 = vmatprep.subr.mxu0 0.0
    %1815 = vmatpush1.msra.mxu0 %v1543
    %1816 = vmatprep.subr.mxu0 0.0
    %1817 = vmatpush1.msra.mxu0 %v1544
    %1818 = vmatprep.subr.mxu0 0.0
    %1819 = vmatpush1.msra.mxu0 %v1545
    %1820 = vmatprep.subr.mxu0 0.0
    %1821 = vmatpush1.msra.mxu0 %v1546
    %1822 = vmatprep.subr.mxu0 0.0
    %1823 = vmatpush1.msra.mxu0 %v1547
    %1824 = vmatprep.subr.mxu0 0.0
    %1825 = vmatpush1.msra.mxu0 %v1548
    %1826 = vmatprep.subr.mxu0 0.0
    %1827 = vmatpush1.msra.mxu0 %v1549
    %1828 = vmatprep.subr.mxu0 0.0
    %1829 = vmatpush1.msra.mxu0 %v1550
    %1830 = vmatprep.subr.mxu0 0.0
    %1831 = vmatpush1.msra.mxu0 %v1551
    %1832 = vmatprep.subr.mxu0 0.0
    %1833 = vmatpush1.msra.mxu0 %v1552
    %1834 = vmatprep.mubr.f32.mxu0 %v1424
    %1835 = vmatmul.mubr.f32.gmra.mrb[0].mxu0 %v1423
    %v1836 = vpop.f32.mrb[0].mxu0
    %v1837 = vadd.f32 %v1767, %v1836
    %v1838 = vpop.f32.mrb[0].mxu0
    %1839 = vdwg.mxu0
    %v1840 = vxor.u32 %v1837, 2147483648
    %v1841 = vmul.f32 %v1840, 1.442695
    %v1842 = vpow.pop %v1841
    %v1843 = vadd.f32 %v1842, 1.0
    %v1844 = vrcp.pop %v1843
    %v1845 = vmul.f32 1.0, %v1844
    %1846 = vst [vmem:[#allocation14] sm:$0xff] %v1845
    // Predicated region
    $region58: #{tpu_custom_call.1} parent=1 // pred_check
      _
    $region59: #{tpu_custom_call.1} parent=1 // pred_check_branch
      %1848 = sbr.rel (0) target = $region61
    $region60: #{tpu_custom_call.1} parent=1 // pred_region
      %s1850 = ssub.s32 128, 128
      %1851 = vsyncadd [#allocation4], %s1850
      %s1853 = sshll.u32 [#allocation14], 4
      %s1854 = int_to_ptr.vmem [resolvable:$true] %s1853
      %1856 = dma.vmem_to_hbm [thread:$0]  %s1854, 128, %s7, [#allocation4]
    $region61: #{tpu_custom_call.1} parent=1 // pred_fallthru
      _
    // Predicated region
    $region62: #{tpu_custom_call.1} parent=1 // pred_check
      _
    $region63: #{tpu_custom_call.1} parent=1 // pred_check_branch
      %1858 = sbr.rel (0) target = $region65
    $region64: #{tpu_custom_call.1} parent=1 // pred_region
      %1859 = dma.done [#allocation4], 128
    $region65: #{tpu_custom_call.1} parent=1 // pred_fallthru
      _
    %1860 = vsyncpa [#allocation3], 1
    %1861 = vsyncpa [#allocation6], 1
    %1862 = vsyncpa [#allocation9], 1
    %1863 = vsyncpa [#allocation12], 1
    %1864 = vsyncpa [#allocation4], 1

</llo_original>
